<compile_context>
chip_gen: v6e
topology: v6e:2x2x1
jax: 0.10.0
libtpu: 0.0.40
codegen_flags: <defaults>
</compile_context>

<pallas_src>
import functools

import jax
import jax.numpy as jnp
from jax.experimental import pallas as pl
from jax.experimental.pallas import tpu as pltpu


LAYER_DIMS = [(1, 5), (5, 10), (10, 10), (10, 5), (5, 1)]


def _param_offsets():
    """Static offsets of each layer's weights/bias inside the flat param array."""
    offsets = []
    o = 0
    for fan_in, fan_out in LAYER_DIMS:
        w_off = o
        b_off = o + fan_in * fan_out
        offsets.append((w_off, b_off))
        o = b_off + fan_out
    return offsets, o


PARAM_OFFSETS, N_PARAMS = _param_offsets()
# flops per batch row: mul+add per weight, plus bias-add + relu per output feature
_FLOPS_PER_ROW = 2 * sum(fi * fo for fi, fo in LAYER_DIMS) + 2 * sum(fo for _, fo in LAYER_DIMS)


def _round_up(x, m):
    return ((x + m - 1) // m) * m


def mlp_kernel(params_ref, x_ref, o_ref, *, compute_dtype):
    """Sublane/lane-dense MLP tile.

    params_ref : (N_PARAMS,) f32 in SMEM (scalar-prefetched flat weights + biases)
    x_ref      : (8, t) f32 in VMEM  -- batch packed on sublanes x lanes
    o_ref      : (8, t) f32 in VMEM
    """
    rows = [x_ref[...].astype(compute_dtype)]  # one (8, t) slab per feature
    for (fan_in, fan_out), (w_off, b_off) in zip(LAYER_DIMS, PARAM_OFFSETS):
        new_rows = []
        for j in range(fan_out):
            # scalar (SMEM) * slab (VMEM) broadcast FMA on the VPU
            w0 = params_ref[w_off + j]
            if compute_dtype != jnp.float32:
                w0 = w0.astype(compute_dtype)
            acc = rows[0] * w0
            for k in range(1, fan_in):
                wk = params_ref[w_off + k * fan_out + j]
                if compute_dtype != jnp.float32:
                    wk = wk.astype(compute_dtype)
                acc = acc + rows[k] * wk
            bj = params_ref[b_off + j]
            if compute_dtype != jnp.float32:
                bj = bj.astype(compute_dtype)
            acc = acc + bj
            new_rows.append(jnp.maximum(acc, 0.0))
        rows = new_rows
    o_ref[...] = rows[0].astype(o_ref.dtype)


def init_params(key):
    """Deterministic init mimicking torch.nn.Linear default (uniform +-1/sqrt(fan_in)).

    Weights are stored pre-transposed as (in_features, out_features); biases as (out,).
    """
    params = []
    for fan_in, fan_out in LAYER_DIMS:
        key, kw, kb = jax.random.split(key, 3)
        bound = 1.0 / (fan_in ** 0.5)
        w = jax.random.uniform(kw, (fan_in, fan_out), jnp.float32, -bound, bound)
        b = jax.random.uniform(kb, (fan_out,), jnp.float32, -bound, bound)
        params.append((w, b))
    return params


def flatten_params(params):
    flat = []
    for w, b in params:
        flat.append(w.reshape(-1))   # row-major (in, out) -> index k*fan_out + j
        flat.append(b.reshape(-1))
    return jnp.concatenate(flat)


def model_forward(x, params_flat, *, tile=8192, compute_dtype=jnp.float32):
    """x: (N, 1) float32 -> (N, 1) float32.

    compute_dtype=jnp.bfloat16 enables the bf16 VALU path (recommended on
    v6e/v7x; keep float32 on v5e where the VPU has no bf16 ALUs).
    """
    n = x.shape[0]
    flat = x.reshape(-1).astype(jnp.float32)

    # Batch is packed as an (8, cols) slab: 8 sublanes x cols lanes.
    cols = pl.cdiv(n, 8)
    cols_pad = _round_up(max(cols, 128), 128)

    # Lane tile: multiple of 128, bounded by the data.
    t = max(128, min(_round_up(int(tile), 128), cols_pad))
    # Prefer >=2 grid steps when possible so v7x's two TensorCores both work.
    if cols_pad // t < 2 and cols_pad >= 256:
        t = _round_up(pl.cdiv(cols_pad, 2), 128)
    cols_pad = _round_up(cols_pad, t)
    n_pad = 8 * cols_pad

    if n_pad == n:
        x_slab = flat.reshape(8, cols_pad)          # free reshape, no copy
    else:
        x_slab = jnp.pad(flat, (0, n_pad - n)).reshape(8, cols_pad)

    grid = (cols_pad // t,)
    kernel = functools.partial(mlp_kernel, compute_dtype=compute_dtype)

    out_slab = pl.pallas_call(
        kernel,
        out_shape=jax.ShapeDtypeStruct((8, cols_pad), jnp.float32),
        grid_spec=pltpu.PrefetchScalarGridSpec(
            num_scalar_prefetch=1,                  # flat params -> SMEM, once
            grid=grid,
            in_specs=[pl.BlockSpec((8, t), lambda i, p: (0, i))],
            out_specs=pl.BlockSpec((8, t), lambda i, p: (0, i)),
        ),
        compiler_params=pltpu.CompilerParams(
            dimension_semantics=("parallel",)),
        cost_estimate=pl.CostEstimate(
            flops=_FLOPS_PER_ROW * n_pad,
            transcendentals=0,
            bytes_accessed=8 * n_pad + 4 * N_PARAMS),
    )(params_flat, x_slab)

    out_flat = out_slab.reshape(n_pad)
    if n_pad != n:
        out_flat = out_flat[:n]
    return out_flat.reshape(n, 1)


def reference_forward(x, params):
    h = x
    for w, b in params:
        h = jnp.maximum(h @ w + b[None, :], 0.0)
    return h


if __name__ == "__main__":
    key = jax.random.PRNGKey(0)
    key, kx1, kx2, kx3 = jax.random.split(key, 4)

    params = init_params(key)
    params_flat = flatten_params(params)

    # Small shape consistent with the module: (batch, 1).
    batch = 8
    x = jax.random.normal(kx1, (batch, 1), jnp.float32)
    out = jax.block_until_ready(model_forward(x, params_flat))
    ref = reference_forward(x, params)
    assert out.shape == (batch, 1)
    assert jnp.allclose(out, ref, atol=1e-5, rtol=1e-5), "mismatch (small batch)"

    # Non-multiple-of-(8*128) batch: exercises padding + multi-step parallel grid.
    batch2 = 5000
    x2 = jax.random.normal(kx2, (batch2, 1), jnp.float32)
    out2 = jax.block_until_ready(model_forward(x2, params_flat, tile=256))
    ref2 = reference_forward(x2, params)
    assert out2.shape == (batch2, 1)
    assert jnp.allclose(out2, ref2, atol=1e-5, rtol=1e-5), "mismatch (padded batch)"

    # Exact multiple of the slab: copy-free reshape path + forced 2-step grid.
    batch3 = 8 * 1024
    x3 = jax.random.normal(kx3, (batch3, 1), jnp.float32)
    out3 = jax.block_until_ready(model_forward(x3, params_flat))
    ref3 = reference_forward(x3, params)
    assert out3.shape == (batch3, 1)
    assert jnp.allclose(out3, ref3, atol=1e-5, rtol=1e-5), "mismatch (large batch)"

    # Optional bf16 VALU path (recommended on v6e/v7x) is available via
    # model_forward(..., compute_dtype=jnp.bfloat16); f32 is the default and
    # the numerically-verified path on all chips (and the right choice on v5e).

    print("KERNEL_OK")
</pallas_src>

<mosaic_0001>
module attributes {stable_mosaic.version = 11 : i64} {
  func.func @mlp_kernel(%arg0: i32, %arg1: memref<241xf32, #tpu.memory_space<smem>>, %arg2: memref<8x128xf32, #tpu.memory_space<vmem>>, %arg3: memref<8x128xf32, #tpu.memory_space<vmem>>) attributes {dimension_semantics = [#tpu.dimension_semantics<parallel>], iteration_bounds = array<i64: 1>, scalar_prefetch = 1 : i64, scratch_operands = 0 : i64, tpu.core_type = #tpu.core_type<tc>, window_params = [{transform_indices = @transform_0, window_bounds = array<i64: 8, 128>}, {transform_indices = @transform_1, window_bounds = array<i64: 8, 128>}]} {
    %c0 = arith.constant 0 : index
    %c0_0 = arith.constant 0 : index
    %0 = vector.load %arg2[%c0, %c0_0] : memref<8x128xf32, #tpu.memory_space<vmem>>, vector<8x128xf32>
    %c0_1 = arith.constant 0 : index
    %1 = memref.load %arg1[%c0_1] : memref<241xf32, #tpu.memory_space<smem>>
    %2 = vector.broadcast %1 : f32 to vector<8x128xf32>
    %3 = arith.mulf %0, %2 : vector<8x128xf32>
    %c5 = arith.constant 5 : index
    %4 = memref.load %arg1[%c5] : memref<241xf32, #tpu.memory_space<smem>>
    %5 = vector.broadcast %4 : f32 to vector<8x128xf32>
    %6 = arith.addf %3, %5 : vector<8x128xf32>
    %cst = arith.constant 0.000000e+00 : f32
    %7 = vector.broadcast %cst : f32 to vector<8x128xf32>
    %8 = arith.maximumf %6, %7 : vector<8x128xf32>
    %c1 = arith.constant 1 : index
    %9 = memref.load %arg1[%c1] : memref<241xf32, #tpu.memory_space<smem>>
    %10 = vector.broadcast %9 : f32 to vector<8x128xf32>
    %11 = arith.mulf %0, %10 : vector<8x128xf32>
    %c6 = arith.constant 6 : index
    %12 = memref.load %arg1[%c6] : memref<241xf32, #tpu.memory_space<smem>>
    %13 = vector.broadcast %12 : f32 to vector<8x128xf32>
    %14 = arith.addf %11, %13 : vector<8x128xf32>
    %cst_2 = arith.constant 0.000000e+00 : f32
    %15 = vector.broadcast %cst_2 : f32 to vector<8x128xf32>
    %16 = arith.maximumf %14, %15 : vector<8x128xf32>
    %c2 = arith.constant 2 : index
    %17 = memref.load %arg1[%c2] : memref<241xf32, #tpu.memory_space<smem>>
    %18 = vector.broadcast %17 : f32 to vector<8x128xf32>
    %19 = arith.mulf %0, %18 : vector<8x128xf32>
    %c7 = arith.constant 7 : index
    %20 = memref.load %arg1[%c7] : memref<241xf32, #tpu.memory_space<smem>>
    %21 = vector.broadcast %20 : f32 to vector<8x128xf32>
    %22 = arith.addf %19, %21 : vector<8x128xf32>
    %cst_3 = arith.constant 0.000000e+00 : f32
    %23 = vector.broadcast %cst_3 : f32 to vector<8x128xf32>
    %24 = arith.maximumf %22, %23 : vector<8x128xf32>
    %c3 = arith.constant 3 : index
    %25 = memref.load %arg1[%c3] : memref<241xf32, #tpu.memory_space<smem>>
    %26 = vector.broadcast %25 : f32 to vector<8x128xf32>
    %27 = arith.mulf %0, %26 : vector<8x128xf32>
    %c8 = arith.constant 8 : index
    %28 = memref.load %arg1[%c8] : memref<241xf32, #tpu.memory_space<smem>>
    %29 = vector.broadcast %28 : f32 to vector<8x128xf32>
    %30 = arith.addf %27, %29 : vector<8x128xf32>
    %cst_4 = arith.constant 0.000000e+00 : f32
    %31 = vector.broadcast %cst_4 : f32 to vector<8x128xf32>
    %32 = arith.maximumf %30, %31 : vector<8x128xf32>
    %c4 = arith.constant 4 : index
    %33 = memref.load %arg1[%c4] : memref<241xf32, #tpu.memory_space<smem>>
    %34 = vector.broadcast %33 : f32 to vector<8x128xf32>
    %35 = arith.mulf %0, %34 : vector<8x128xf32>
    %c9 = arith.constant 9 : index
    %36 = memref.load %arg1[%c9] : memref<241xf32, #tpu.memory_space<smem>>
    %37 = vector.broadcast %36 : f32 to vector<8x128xf32>
    %38 = arith.addf %35, %37 : vector<8x128xf32>
    %cst_5 = arith.constant 0.000000e+00 : f32
    %39 = vector.broadcast %cst_5 : f32 to vector<8x128xf32>
    %40 = arith.maximumf %38, %39 : vector<8x128xf32>
    %c10 = arith.constant 10 : index
    %41 = memref.load %arg1[%c10] : memref<241xf32, #tpu.memory_space<smem>>
    %42 = vector.broadcast %41 : f32 to vector<8x128xf32>
    %43 = arith.mulf %8, %42 : vector<8x128xf32>
    %c20 = arith.constant 20 : index
    %44 = memref.load %arg1[%c20] : memref<241xf32, #tpu.memory_space<smem>>
    %45 = vector.broadcast %44 : f32 to vector<8x128xf32>
    %46 = arith.mulf %16, %45 : vector<8x128xf32>
    %47 = arith.addf %43, %46 : vector<8x128xf32>
    %c30 = arith.constant 30 : index
    %48 = memref.load %arg1[%c30] : memref<241xf32, #tpu.memory_space<smem>>
    %49 = vector.broadcast %48 : f32 to vector<8x128xf32>
    %50 = arith.mulf %24, %49 : vector<8x128xf32>
    %51 = arith.addf %47, %50 : vector<8x128xf32>
    %c40 = arith.constant 40 : index
    %52 = memref.load %arg1[%c40] : memref<241xf32, #tpu.memory_space<smem>>
    %53 = vector.broadcast %52 : f32 to vector<8x128xf32>
    %54 = arith.mulf %32, %53 : vector<8x128xf32>
    %55 = arith.addf %51, %54 : vector<8x128xf32>
    %c50 = arith.constant 50 : index
    %56 = memref.load %arg1[%c50] : memref<241xf32, #tpu.memory_space<smem>>
    %57 = vector.broadcast %56 : f32 to vector<8x128xf32>
    %58 = arith.mulf %40, %57 : vector<8x128xf32>
    %59 = arith.addf %55, %58 : vector<8x128xf32>
    %c60 = arith.constant 60 : index
    %60 = memref.load %arg1[%c60] : memref<241xf32, #tpu.memory_space<smem>>
    %61 = vector.broadcast %60 : f32 to vector<8x128xf32>
    %62 = arith.addf %59, %61 : vector<8x128xf32>
    %cst_6 = arith.constant 0.000000e+00 : f32
    %63 = vector.broadcast %cst_6 : f32 to vector<8x128xf32>
    %64 = arith.maximumf %62, %63 : vector<8x128xf32>
    %c11 = arith.constant 11 : index
    %65 = memref.load %arg1[%c11] : memref<241xf32, #tpu.memory_space<smem>>
    %66 = vector.broadcast %65 : f32 to vector<8x128xf32>
    %67 = arith.mulf %8, %66 : vector<8x128xf32>
    %c21 = arith.constant 21 : index
    %68 = memref.load %arg1[%c21] : memref<241xf32, #tpu.memory_space<smem>>
    %69 = vector.broadcast %68 : f32 to vector<8x128xf32>
    %70 = arith.mulf %16, %69 : vector<8x128xf32>
    %71 = arith.addf %67, %70 : vector<8x128xf32>
    %c31 = arith.constant 31 : index
    %72 = memref.load %arg1[%c31] : memref<241xf32, #tpu.memory_space<smem>>
    %73 = vector.broadcast %72 : f32 to vector<8x128xf32>
    %74 = arith.mulf %24, %73 : vector<8x128xf32>
    %75 = arith.addf %71, %74 : vector<8x128xf32>
    %c41 = arith.constant 41 : index
    %76 = memref.load %arg1[%c41] : memref<241xf32, #tpu.memory_space<smem>>
    %77 = vector.broadcast %76 : f32 to vector<8x128xf32>
    %78 = arith.mulf %32, %77 : vector<8x128xf32>
    %79 = arith.addf %75, %78 : vector<8x128xf32>
    %c51 = arith.constant 51 : index
    %80 = memref.load %arg1[%c51] : memref<241xf32, #tpu.memory_space<smem>>
    %81 = vector.broadcast %80 : f32 to vector<8x128xf32>
    %82 = arith.mulf %40, %81 : vector<8x128xf32>
    %83 = arith.addf %79, %82 : vector<8x128xf32>
    %c61 = arith.constant 61 : index
    %84 = memref.load %arg1[%c61] : memref<241xf32, #tpu.memory_space<smem>>
    %85 = vector.broadcast %84 : f32 to vector<8x128xf32>
    %86 = arith.addf %83, %85 : vector<8x128xf32>
    %cst_7 = arith.constant 0.000000e+00 : f32
    %87 = vector.broadcast %cst_7 : f32 to vector<8x128xf32>
    %88 = arith.maximumf %86, %87 : vector<8x128xf32>
    %c12 = arith.constant 12 : index
    %89 = memref.load %arg1[%c12] : memref<241xf32, #tpu.memory_space<smem>>
    %90 = vector.broadcast %89 : f32 to vector<8x128xf32>
    %91 = arith.mulf %8, %90 : vector<8x128xf32>
    %c22 = arith.constant 22 : index
    %92 = memref.load %arg1[%c22] : memref<241xf32, #tpu.memory_space<smem>>
    %93 = vector.broadcast %92 : f32 to vector<8x128xf32>
    %94 = arith.mulf %16, %93 : vector<8x128xf32>
    %95 = arith.addf %91, %94 : vector<8x128xf32>
    %c32 = arith.constant 32 : index
    %96 = memref.load %arg1[%c32] : memref<241xf32, #tpu.memory_space<smem>>
    %97 = vector.broadcast %96 : f32 to vector<8x128xf32>
    %98 = arith.mulf %24, %97 : vector<8x128xf32>
    %99 = arith.addf %95, %98 : vector<8x128xf32>
    %c42 = arith.constant 42 : index
    %100 = memref.load %arg1[%c42] : memref<241xf32, #tpu.memory_space<smem>>
    %101 = vector.broadcast %100 : f32 to vector<8x128xf32>
    %102 = arith.mulf %32, %101 : vector<8x128xf32>
    %103 = arith.addf %99, %102 : vector<8x128xf32>
    %c52 = arith.constant 52 : index
    %104 = memref.load %arg1[%c52] : memref<241xf32, #tpu.memory_space<smem>>
    %105 = vector.broadcast %104 : f32 to vector<8x128xf32>
    %106 = arith.mulf %40, %105 : vector<8x128xf32>
    %107 = arith.addf %103, %106 : vector<8x128xf32>
    %c62 = arith.constant 62 : index
    %108 = memref.load %arg1[%c62] : memref<241xf32, #tpu.memory_space<smem>>
    %109 = vector.broadcast %108 : f32 to vector<8x128xf32>
    %110 = arith.addf %107, %109 : vector<8x128xf32>
    %cst_8 = arith.constant 0.000000e+00 : f32
    %111 = vector.broadcast %cst_8 : f32 to vector<8x128xf32>
    %112 = arith.maximumf %110, %111 : vector<8x128xf32>
    %c13 = arith.constant 13 : index
    %113 = memref.load %arg1[%c13] : memref<241xf32, #tpu.memory_space<smem>>
    %114 = vector.broadcast %113 : f32 to vector<8x128xf32>
    %115 = arith.mulf %8, %114 : vector<8x128xf32>
    %c23 = arith.constant 23 : index
    %116 = memref.load %arg1[%c23] : memref<241xf32, #tpu.memory_space<smem>>
    %117 = vector.broadcast %116 : f32 to vector<8x128xf32>
    %118 = arith.mulf %16, %117 : vector<8x128xf32>
    %119 = arith.addf %115, %118 : vector<8x128xf32>
    %c33 = arith.constant 33 : index
    %120 = memref.load %arg1[%c33] : memref<241xf32, #tpu.memory_space<smem>>
    %121 = vector.broadcast %120 : f32 to vector<8x128xf32>
    %122 = arith.mulf %24, %121 : vector<8x128xf32>
    %123 = arith.addf %119, %122 : vector<8x128xf32>
    %c43 = arith.constant 43 : index
    %124 = memref.load %arg1[%c43] : memref<241xf32, #tpu.memory_space<smem>>
    %125 = vector.broadcast %124 : f32 to vector<8x128xf32>
    %126 = arith.mulf %32, %125 : vector<8x128xf32>
    %127 = arith.addf %123, %126 : vector<8x128xf32>
    %c53 = arith.constant 53 : index
    %128 = memref.load %arg1[%c53] : memref<241xf32, #tpu.memory_space<smem>>
    %129 = vector.broadcast %128 : f32 to vector<8x128xf32>
    %130 = arith.mulf %40, %129 : vector<8x128xf32>
    %131 = arith.addf %127, %130 : vector<8x128xf32>
    %c63 = arith.constant 63 : index
    %132 = memref.load %arg1[%c63] : memref<241xf32, #tpu.memory_space<smem>>
    %133 = vector.broadcast %132 : f32 to vector<8x128xf32>
    %134 = arith.addf %131, %133 : vector<8x128xf32>
    %cst_9 = arith.constant 0.000000e+00 : f32
    %135 = vector.broadcast %cst_9 : f32 to vector<8x128xf32>
    %136 = arith.maximumf %134, %135 : vector<8x128xf32>
    %c14 = arith.constant 14 : index
    %137 = memref.load %arg1[%c14] : memref<241xf32, #tpu.memory_space<smem>>
    %138 = vector.broadcast %137 : f32 to vector<8x128xf32>
    %139 = arith.mulf %8, %138 : vector<8x128xf32>
    %c24 = arith.constant 24 : index
    %140 = memref.load %arg1[%c24] : memref<241xf32, #tpu.memory_space<smem>>
    %141 = vector.broadcast %140 : f32 to vector<8x128xf32>
    %142 = arith.mulf %16, %141 : vector<8x128xf32>
    %143 = arith.addf %139, %142 : vector<8x128xf32>
    %c34 = arith.constant 34 : index
    %144 = memref.load %arg1[%c34] : memref<241xf32, #tpu.memory_space<smem>>
    %145 = vector.broadcast %144 : f32 to vector<8x128xf32>
    %146 = arith.mulf %24, %145 : vector<8x128xf32>
    %147 = arith.addf %143, %146 : vector<8x128xf32>
    %c44 = arith.constant 44 : index
    %148 = memref.load %arg1[%c44] : memref<241xf32, #tpu.memory_space<smem>>
    %149 = vector.broadcast %148 : f32 to vector<8x128xf32>
    %150 = arith.mulf %32, %149 : vector<8x128xf32>
    %151 = arith.addf %147, %150 : vector<8x128xf32>
    %c54 = arith.constant 54 : index
    %152 = memref.load %arg1[%c54] : memref<241xf32, #tpu.memory_space<smem>>
    %153 = vector.broadcast %152 : f32 to vector<8x128xf32>
    %154 = arith.mulf %40, %153 : vector<8x128xf32>
    %155 = arith.addf %151, %154 : vector<8x128xf32>
    %c64 = arith.constant 64 : index
    %156 = memref.load %arg1[%c64] : memref<241xf32, #tpu.memory_space<smem>>
    %157 = vector.broadcast %156 : f32 to vector<8x128xf32>
    %158 = arith.addf %155, %157 : vector<8x128xf32>
    %cst_10 = arith.constant 0.000000e+00 : f32
    %159 = vector.broadcast %cst_10 : f32 to vector<8x128xf32>
    %160 = arith.maximumf %158, %159 : vector<8x128xf32>
    %c15 = arith.constant 15 : index
    %161 = memref.load %arg1[%c15] : memref<241xf32, #tpu.memory_space<smem>>
    %162 = vector.broadcast %161 : f32 to vector<8x128xf32>
    %163 = arith.mulf %8, %162 : vector<8x128xf32>
    %c25 = arith.constant 25 : index
    %164 = memref.load %arg1[%c25] : memref<241xf32, #tpu.memory_space<smem>>
    %165 = vector.broadcast %164 : f32 to vector<8x128xf32>
    %166 = arith.mulf %16, %165 : vector<8x128xf32>
    %167 = arith.addf %163, %166 : vector<8x128xf32>
    %c35 = arith.constant 35 : index
    %168 = memref.load %arg1[%c35] : memref<241xf32, #tpu.memory_space<smem>>
    %169 = vector.broadcast %168 : f32 to vector<8x128xf32>
    %170 = arith.mulf %24, %169 : vector<8x128xf32>
    %171 = arith.addf %167, %170 : vector<8x128xf32>
    %c45 = arith.constant 45 : index
    %172 = memref.load %arg1[%c45] : memref<241xf32, #tpu.memory_space<smem>>
    %173 = vector.broadcast %172 : f32 to vector<8x128xf32>
    %174 = arith.mulf %32, %173 : vector<8x128xf32>
    %175 = arith.addf %171, %174 : vector<8x128xf32>
    %c55 = arith.constant 55 : index
    %176 = memref.load %arg1[%c55] : memref<241xf32, #tpu.memory_space<smem>>
    %177 = vector.broadcast %176 : f32 to vector<8x128xf32>
    %178 = arith.mulf %40, %177 : vector<8x128xf32>
    %179 = arith.addf %175, %178 : vector<8x128xf32>
    %c65 = arith.constant 65 : index
    %180 = memref.load %arg1[%c65] : memref<241xf32, #tpu.memory_space<smem>>
    %181 = vector.broadcast %180 : f32 to vector<8x128xf32>
    %182 = arith.addf %179, %181 : vector<8x128xf32>
    %cst_11 = arith.constant 0.000000e+00 : f32
    %183 = vector.broadcast %cst_11 : f32 to vector<8x128xf32>
    %184 = arith.maximumf %182, %183 : vector<8x128xf32>
    %c16 = arith.constant 16 : index
    %185 = memref.load %arg1[%c16] : memref<241xf32, #tpu.memory_space<smem>>
    %186 = vector.broadcast %185 : f32 to vector<8x128xf32>
    %187 = arith.mulf %8, %186 : vector<8x128xf32>
    %c26 = arith.constant 26 : index
    %188 = memref.load %arg1[%c26] : memref<241xf32, #tpu.memory_space<smem>>
    %189 = vector.broadcast %188 : f32 to vector<8x128xf32>
    %190 = arith.mulf %16, %189 : vector<8x128xf32>
    %191 = arith.addf %187, %190 : vector<8x128xf32>
    %c36 = arith.constant 36 : index
    %192 = memref.load %arg1[%c36] : memref<241xf32, #tpu.memory_space<smem>>
    %193 = vector.broadcast %192 : f32 to vector<8x128xf32>
    %194 = arith.mulf %24, %193 : vector<8x128xf32>
    %195 = arith.addf %191, %194 : vector<8x128xf32>
    %c46 = arith.constant 46 : index
    %196 = memref.load %arg1[%c46] : memref<241xf32, #tpu.memory_space<smem>>
    %197 = vector.broadcast %196 : f32 to vector<8x128xf32>
    %198 = arith.mulf %32, %197 : vector<8x128xf32>
    %199 = arith.addf %195, %198 : vector<8x128xf32>
    %c56 = arith.constant 56 : index
    %200 = memref.load %arg1[%c56] : memref<241xf32, #tpu.memory_space<smem>>
    %201 = vector.broadcast %200 : f32 to vector<8x128xf32>
    %202 = arith.mulf %40, %201 : vector<8x128xf32>
    %203 = arith.addf %199, %202 : vector<8x128xf32>
    %c66 = arith.constant 66 : index
    %204 = memref.load %arg1[%c66] : memref<241xf32, #tpu.memory_space<smem>>
    %205 = vector.broadcast %204 : f32 to vector<8x128xf32>
    %206 = arith.addf %203, %205 : vector<8x128xf32>
    %cst_12 = arith.constant 0.000000e+00 : f32
    %207 = vector.broadcast %cst_12 : f32 to vector<8x128xf32>
    %208 = arith.maximumf %206, %207 : vector<8x128xf32>
    %c17 = arith.constant 17 : index
    %209 = memref.load %arg1[%c17] : memref<241xf32, #tpu.memory_space<smem>>
    %210 = vector.broadcast %209 : f32 to vector<8x128xf32>
    %211 = arith.mulf %8, %210 : vector<8x128xf32>
    %c27 = arith.constant 27 : index
    %212 = memref.load %arg1[%c27] : memref<241xf32, #tpu.memory_space<smem>>
    %213 = vector.broadcast %212 : f32 to vector<8x128xf32>
    %214 = arith.mulf %16, %213 : vector<8x128xf32>
    %215 = arith.addf %211, %214 : vector<8x128xf32>
    %c37 = arith.constant 37 : index
    %216 = memref.load %arg1[%c37] : memref<241xf32, #tpu.memory_space<smem>>
    %217 = vector.broadcast %216 : f32 to vector<8x128xf32>
    %218 = arith.mulf %24, %217 : vector<8x128xf32>
    %219 = arith.addf %215, %218 : vector<8x128xf32>
    %c47 = arith.constant 47 : index
    %220 = memref.load %arg1[%c47] : memref<241xf32, #tpu.memory_space<smem>>
    %221 = vector.broadcast %220 : f32 to vector<8x128xf32>
    %222 = arith.mulf %32, %221 : vector<8x128xf32>
    %223 = arith.addf %219, %222 : vector<8x128xf32>
    %c57 = arith.constant 57 : index
    %224 = memref.load %arg1[%c57] : memref<241xf32, #tpu.memory_space<smem>>
    %225 = vector.broadcast %224 : f32 to vector<8x128xf32>
    %226 = arith.mulf %40, %225 : vector<8x128xf32>
    %227 = arith.addf %223, %226 : vector<8x128xf32>
    %c67 = arith.constant 67 : index
    %228 = memref.load %arg1[%c67] : memref<241xf32, #tpu.memory_space<smem>>
    %229 = vector.broadcast %228 : f32 to vector<8x128xf32>
    %230 = arith.addf %227, %229 : vector<8x128xf32>
    %cst_13 = arith.constant 0.000000e+00 : f32
    %231 = vector.broadcast %cst_13 : f32 to vector<8x128xf32>
    %232 = arith.maximumf %230, %231 : vector<8x128xf32>
    %c18 = arith.constant 18 : index
    %233 = memref.load %arg1[%c18] : memref<241xf32, #tpu.memory_space<smem>>
    %234 = vector.broadcast %233 : f32 to vector<8x128xf32>
    %235 = arith.mulf %8, %234 : vector<8x128xf32>
    %c28 = arith.constant 28 : index
    %236 = memref.load %arg1[%c28] : memref<241xf32, #tpu.memory_space<smem>>
    %237 = vector.broadcast %236 : f32 to vector<8x128xf32>
    %238 = arith.mulf %16, %237 : vector<8x128xf32>
    %239 = arith.addf %235, %238 : vector<8x128xf32>
    %c38 = arith.constant 38 : index
    %240 = memref.load %arg1[%c38] : memref<241xf32, #tpu.memory_space<smem>>
    %241 = vector.broadcast %240 : f32 to vector<8x128xf32>
    %242 = arith.mulf %24, %241 : vector<8x128xf32>
    %243 = arith.addf %239, %242 : vector<8x128xf32>
    %c48 = arith.constant 48 : index
    %244 = memref.load %arg1[%c48] : memref<241xf32, #tpu.memory_space<smem>>
    %245 = vector.broadcast %244 : f32 to vector<8x128xf32>
    %246 = arith.mulf %32, %245 : vector<8x128xf32>
    %247 = arith.addf %243, %246 : vector<8x128xf32>
    %c58 = arith.constant 58 : index
    %248 = memref.load %arg1[%c58] : memref<241xf32, #tpu.memory_space<smem>>
    %249 = vector.broadcast %248 : f32 to vector<8x128xf32>
    %250 = arith.mulf %40, %249 : vector<8x128xf32>
    %251 = arith.addf %247, %250 : vector<8x128xf32>
    %c68 = arith.constant 68 : index
    %252 = memref.load %arg1[%c68] : memref<241xf32, #tpu.memory_space<smem>>
    %253 = vector.broadcast %252 : f32 to vector<8x128xf32>
    %254 = arith.addf %251, %253 : vector<8x128xf32>
    %cst_14 = arith.constant 0.000000e+00 : f32
    %255 = vector.broadcast %cst_14 : f32 to vector<8x128xf32>
    %256 = arith.maximumf %254, %255 : vector<8x128xf32>
    %c19 = arith.constant 19 : index
    %257 = memref.load %arg1[%c19] : memref<241xf32, #tpu.memory_space<smem>>
    %258 = vector.broadcast %257 : f32 to vector<8x128xf32>
    %259 = arith.mulf %8, %258 : vector<8x128xf32>
    %c29 = arith.constant 29 : index
    %260 = memref.load %arg1[%c29] : memref<241xf32, #tpu.memory_space<smem>>
    %261 = vector.broadcast %260 : f32 to vector<8x128xf32>
    %262 = arith.mulf %16, %261 : vector<8x128xf32>
    %263 = arith.addf %259, %262 : vector<8x128xf32>
    %c39 = arith.constant 39 : index
    %264 = memref.load %arg1[%c39] : memref<241xf32, #tpu.memory_space<smem>>
    %265 = vector.broadcast %264 : f32 to vector<8x128xf32>
    %266 = arith.mulf %24, %265 : vector<8x128xf32>
    %267 = arith.addf %263, %266 : vector<8x128xf32>
    %c49 = arith.constant 49 : index
    %268 = memref.load %arg1[%c49] : memref<241xf32, #tpu.memory_space<smem>>
    %269 = vector.broadcast %268 : f32 to vector<8x128xf32>
    %270 = arith.mulf %32, %269 : vector<8x128xf32>
    %271 = arith.addf %267, %270 : vector<8x128xf32>
    %c59 = arith.constant 59 : index
    %272 = memref.load %arg1[%c59] : memref<241xf32, #tpu.memory_space<smem>>
    %273 = vector.broadcast %272 : f32 to vector<8x128xf32>
    %274 = arith.mulf %40, %273 : vector<8x128xf32>
    %275 = arith.addf %271, %274 : vector<8x128xf32>
    %c69 = arith.constant 69 : index
    %276 = memref.load %arg1[%c69] : memref<241xf32, #tpu.memory_space<smem>>
    %277 = vector.broadcast %276 : f32 to vector<8x128xf32>
    %278 = arith.addf %275, %277 : vector<8x128xf32>
    %cst_15 = arith.constant 0.000000e+00 : f32
    %279 = vector.broadcast %cst_15 : f32 to vector<8x128xf32>
    %280 = arith.maximumf %278, %279 : vector<8x128xf32>
    %c70 = arith.constant 70 : index
    %281 = memref.load %arg1[%c70] : memref<241xf32, #tpu.memory_space<smem>>
    %282 = vector.broadcast %281 : f32 to vector<8x128xf32>
    %283 = arith.mulf %64, %282 : vector<8x128xf32>
    %c80 = arith.constant 80 : index
    %284 = memref.load %arg1[%c80] : memref<241xf32, #tpu.memory_space<smem>>
    %285 = vector.broadcast %284 : f32 to vector<8x128xf32>
    %286 = arith.mulf %88, %285 : vector<8x128xf32>
    %287 = arith.addf %283, %286 : vector<8x128xf32>
    %c90 = arith.constant 90 : index
    %288 = memref.load %arg1[%c90] : memref<241xf32, #tpu.memory_space<smem>>
    %289 = vector.broadcast %288 : f32 to vector<8x128xf32>
    %290 = arith.mulf %112, %289 : vector<8x128xf32>
    %291 = arith.addf %287, %290 : vector<8x128xf32>
    %c100 = arith.constant 100 : index
    %292 = memref.load %arg1[%c100] : memref<241xf32, #tpu.memory_space<smem>>
    %293 = vector.broadcast %292 : f32 to vector<8x128xf32>
    %294 = arith.mulf %136, %293 : vector<8x128xf32>
    %295 = arith.addf %291, %294 : vector<8x128xf32>
    %c110 = arith.constant 110 : index
    %296 = memref.load %arg1[%c110] : memref<241xf32, #tpu.memory_space<smem>>
    %297 = vector.broadcast %296 : f32 to vector<8x128xf32>
    %298 = arith.mulf %160, %297 : vector<8x128xf32>
    %299 = arith.addf %295, %298 : vector<8x128xf32>
    %c120 = arith.constant 120 : index
    %300 = memref.load %arg1[%c120] : memref<241xf32, #tpu.memory_space<smem>>
    %301 = vector.broadcast %300 : f32 to vector<8x128xf32>
    %302 = arith.mulf %184, %301 : vector<8x128xf32>
    %303 = arith.addf %299, %302 : vector<8x128xf32>
    %c130 = arith.constant 130 : index
    %304 = memref.load %arg1[%c130] : memref<241xf32, #tpu.memory_space<smem>>
    %305 = vector.broadcast %304 : f32 to vector<8x128xf32>
    %306 = arith.mulf %208, %305 : vector<8x128xf32>
    %307 = arith.addf %303, %306 : vector<8x128xf32>
    %c140 = arith.constant 140 : index
    %308 = memref.load %arg1[%c140] : memref<241xf32, #tpu.memory_space<smem>>
    %309 = vector.broadcast %308 : f32 to vector<8x128xf32>
    %310 = arith.mulf %232, %309 : vector<8x128xf32>
    %311 = arith.addf %307, %310 : vector<8x128xf32>
    %c150 = arith.constant 150 : index
    %312 = memref.load %arg1[%c150] : memref<241xf32, #tpu.memory_space<smem>>
    %313 = vector.broadcast %312 : f32 to vector<8x128xf32>
    %314 = arith.mulf %256, %313 : vector<8x128xf32>
    %315 = arith.addf %311, %314 : vector<8x128xf32>
    %c160 = arith.constant 160 : index
    %316 = memref.load %arg1[%c160] : memref<241xf32, #tpu.memory_space<smem>>
    %317 = vector.broadcast %316 : f32 to vector<8x128xf32>
    %318 = arith.mulf %280, %317 : vector<8x128xf32>
    %319 = arith.addf %315, %318 : vector<8x128xf32>
    %c170 = arith.constant 170 : index
    %320 = memref.load %arg1[%c170] : memref<241xf32, #tpu.memory_space<smem>>
    %321 = vector.broadcast %320 : f32 to vector<8x128xf32>
    %322 = arith.addf %319, %321 : vector<8x128xf32>
    %cst_16 = arith.constant 0.000000e+00 : f32
    %323 = vector.broadcast %cst_16 : f32 to vector<8x128xf32>
    %324 = arith.maximumf %322, %323 : vector<8x128xf32>
    %c71 = arith.constant 71 : index
    %325 = memref.load %arg1[%c71] : memref<241xf32, #tpu.memory_space<smem>>
    %326 = vector.broadcast %325 : f32 to vector<8x128xf32>
    %327 = arith.mulf %64, %326 : vector<8x128xf32>
    %c81 = arith.constant 81 : index
    %328 = memref.load %arg1[%c81] : memref<241xf32, #tpu.memory_space<smem>>
    %329 = vector.broadcast %328 : f32 to vector<8x128xf32>
    %330 = arith.mulf %88, %329 : vector<8x128xf32>
    %331 = arith.addf %327, %330 : vector<8x128xf32>
    %c91 = arith.constant 91 : index
    %332 = memref.load %arg1[%c91] : memref<241xf32, #tpu.memory_space<smem>>
    %333 = vector.broadcast %332 : f32 to vector<8x128xf32>
    %334 = arith.mulf %112, %333 : vector<8x128xf32>
    %335 = arith.addf %331, %334 : vector<8x128xf32>
    %c101 = arith.constant 101 : index
    %336 = memref.load %arg1[%c101] : memref<241xf32, #tpu.memory_space<smem>>
    %337 = vector.broadcast %336 : f32 to vector<8x128xf32>
    %338 = arith.mulf %136, %337 : vector<8x128xf32>
    %339 = arith.addf %335, %338 : vector<8x128xf32>
    %c111 = arith.constant 111 : index
    %340 = memref.load %arg1[%c111] : memref<241xf32, #tpu.memory_space<smem>>
    %341 = vector.broadcast %340 : f32 to vector<8x128xf32>
    %342 = arith.mulf %160, %341 : vector<8x128xf32>
    %343 = arith.addf %339, %342 : vector<8x128xf32>
    %c121 = arith.constant 121 : index
    %344 = memref.load %arg1[%c121] : memref<241xf32, #tpu.memory_space<smem>>
    %345 = vector.broadcast %344 : f32 to vector<8x128xf32>
    %346 = arith.mulf %184, %345 : vector<8x128xf32>
    %347 = arith.addf %343, %346 : vector<8x128xf32>
    %c131 = arith.constant 131 : index
    %348 = memref.load %arg1[%c131] : memref<241xf32, #tpu.memory_space<smem>>
    %349 = vector.broadcast %348 : f32 to vector<8x128xf32>
    %350 = arith.mulf %208, %349 : vector<8x128xf32>
    %351 = arith.addf %347, %350 : vector<8x128xf32>
    %c141 = arith.constant 141 : index
    %352 = memref.load %arg1[%c141] : memref<241xf32, #tpu.memory_space<smem>>
    %353 = vector.broadcast %352 : f32 to vector<8x128xf32>
    %354 = arith.mulf %232, %353 : vector<8x128xf32>
    %355 = arith.addf %351, %354 : vector<8x128xf32>
    %c151 = arith.constant 151 : index
    %356 = memref.load %arg1[%c151] : memref<241xf32, #tpu.memory_space<smem>>
    %357 = vector.broadcast %356 : f32 to vector<8x128xf32>
    %358 = arith.mulf %256, %357 : vector<8x128xf32>
    %359 = arith.addf %355, %358 : vector<8x128xf32>
    %c161 = arith.constant 161 : index
    %360 = memref.load %arg1[%c161] : memref<241xf32, #tpu.memory_space<smem>>
    %361 = vector.broadcast %360 : f32 to vector<8x128xf32>
    %362 = arith.mulf %280, %361 : vector<8x128xf32>
    %363 = arith.addf %359, %362 : vector<8x128xf32>
    %c171 = arith.constant 171 : index
    %364 = memref.load %arg1[%c171] : memref<241xf32, #tpu.memory_space<smem>>
    %365 = vector.broadcast %364 : f32 to vector<8x128xf32>
    %366 = arith.addf %363, %365 : vector<8x128xf32>
    %cst_17 = arith.constant 0.000000e+00 : f32
    %367 = vector.broadcast %cst_17 : f32 to vector<8x128xf32>
    %368 = arith.maximumf %366, %367 : vector<8x128xf32>
    %c72 = arith.constant 72 : index
    %369 = memref.load %arg1[%c72] : memref<241xf32, #tpu.memory_space<smem>>
    %370 = vector.broadcast %369 : f32 to vector<8x128xf32>
    %371 = arith.mulf %64, %370 : vector<8x128xf32>
    %c82 = arith.constant 82 : index
    %372 = memref.load %arg1[%c82] : memref<241xf32, #tpu.memory_space<smem>>
    %373 = vector.broadcast %372 : f32 to vector<8x128xf32>
    %374 = arith.mulf %88, %373 : vector<8x128xf32>
    %375 = arith.addf %371, %374 : vector<8x128xf32>
    %c92 = arith.constant 92 : index
    %376 = memref.load %arg1[%c92] : memref<241xf32, #tpu.memory_space<smem>>
    %377 = vector.broadcast %376 : f32 to vector<8x128xf32>
    %378 = arith.mulf %112, %377 : vector<8x128xf32>
    %379 = arith.addf %375, %378 : vector<8x128xf32>
    %c102 = arith.constant 102 : index
    %380 = memref.load %arg1[%c102] : memref<241xf32, #tpu.memory_space<smem>>
    %381 = vector.broadcast %380 : f32 to vector<8x128xf32>
    %382 = arith.mulf %136, %381 : vector<8x128xf32>
    %383 = arith.addf %379, %382 : vector<8x128xf32>
    %c112 = arith.constant 112 : index
    %384 = memref.load %arg1[%c112] : memref<241xf32, #tpu.memory_space<smem>>
    %385 = vector.broadcast %384 : f32 to vector<8x128xf32>
    %386 = arith.mulf %160, %385 : vector<8x128xf32>
    %387 = arith.addf %383, %386 : vector<8x128xf32>
    %c122 = arith.constant 122 : index
    %388 = memref.load %arg1[%c122] : memref<241xf32, #tpu.memory_space<smem>>
    %389 = vector.broadcast %388 : f32 to vector<8x128xf32>
    %390 = arith.mulf %184, %389 : vector<8x128xf32>
    %391 = arith.addf %387, %390 : vector<8x128xf32>
    %c132 = arith.constant 132 : index
    %392 = memref.load %arg1[%c132] : memref<241xf32, #tpu.memory_space<smem>>
    %393 = vector.broadcast %392 : f32 to vector<8x128xf32>
    %394 = arith.mulf %208, %393 : vector<8x128xf32>
    %395 = arith.addf %391, %394 : vector<8x128xf32>
    %c142 = arith.constant 142 : index
    %396 = memref.load %arg1[%c142] : memref<241xf32, #tpu.memory_space<smem>>
    %397 = vector.broadcast %396 : f32 to vector<8x128xf32>
    %398 = arith.mulf %232, %397 : vector<8x128xf32>
    %399 = arith.addf %395, %398 : vector<8x128xf32>
    %c152 = arith.constant 152 : index
    %400 = memref.load %arg1[%c152] : memref<241xf32, #tpu.memory_space<smem>>
    %401 = vector.broadcast %400 : f32 to vector<8x128xf32>
    %402 = arith.mulf %256, %401 : vector<8x128xf32>
    %403 = arith.addf %399, %402 : vector<8x128xf32>
    %c162 = arith.constant 162 : index
    %404 = memref.load %arg1[%c162] : memref<241xf32, #tpu.memory_space<smem>>
    %405 = vector.broadcast %404 : f32 to vector<8x128xf32>
    %406 = arith.mulf %280, %405 : vector<8x128xf32>
    %407 = arith.addf %403, %406 : vector<8x128xf32>
    %c172 = arith.constant 172 : index
    %408 = memref.load %arg1[%c172] : memref<241xf32, #tpu.memory_space<smem>>
    %409 = vector.broadcast %408 : f32 to vector<8x128xf32>
    %410 = arith.addf %407, %409 : vector<8x128xf32>
    %cst_18 = arith.constant 0.000000e+00 : f32
    %411 = vector.broadcast %cst_18 : f32 to vector<8x128xf32>
    %412 = arith.maximumf %410, %411 : vector<8x128xf32>
    %c73 = arith.constant 73 : index
    %413 = memref.load %arg1[%c73] : memref<241xf32, #tpu.memory_space<smem>>
    %414 = vector.broadcast %413 : f32 to vector<8x128xf32>
    %415 = arith.mulf %64, %414 : vector<8x128xf32>
    %c83 = arith.constant 83 : index
    %416 = memref.load %arg1[%c83] : memref<241xf32, #tpu.memory_space<smem>>
    %417 = vector.broadcast %416 : f32 to vector<8x128xf32>
    %418 = arith.mulf %88, %417 : vector<8x128xf32>
    %419 = arith.addf %415, %418 : vector<8x128xf32>
    %c93 = arith.constant 93 : index
    %420 = memref.load %arg1[%c93] : memref<241xf32, #tpu.memory_space<smem>>
    %421 = vector.broadcast %420 : f32 to vector<8x128xf32>
    %422 = arith.mulf %112, %421 : vector<8x128xf32>
    %423 = arith.addf %419, %422 : vector<8x128xf32>
    %c103 = arith.constant 103 : index
    %424 = memref.load %arg1[%c103] : memref<241xf32, #tpu.memory_space<smem>>
    %425 = vector.broadcast %424 : f32 to vector<8x128xf32>
    %426 = arith.mulf %136, %425 : vector<8x128xf32>
    %427 = arith.addf %423, %426 : vector<8x128xf32>
    %c113 = arith.constant 113 : index
    %428 = memref.load %arg1[%c113] : memref<241xf32, #tpu.memory_space<smem>>
    %429 = vector.broadcast %428 : f32 to vector<8x128xf32>
    %430 = arith.mulf %160, %429 : vector<8x128xf32>
    %431 = arith.addf %427, %430 : vector<8x128xf32>
    %c123 = arith.constant 123 : index
    %432 = memref.load %arg1[%c123] : memref<241xf32, #tpu.memory_space<smem>>
    %433 = vector.broadcast %432 : f32 to vector<8x128xf32>
    %434 = arith.mulf %184, %433 : vector<8x128xf32>
    %435 = arith.addf %431, %434 : vector<8x128xf32>
    %c133 = arith.constant 133 : index
    %436 = memref.load %arg1[%c133] : memref<241xf32, #tpu.memory_space<smem>>
    %437 = vector.broadcast %436 : f32 to vector<8x128xf32>
    %438 = arith.mulf %208, %437 : vector<8x128xf32>
    %439 = arith.addf %435, %438 : vector<8x128xf32>
    %c143 = arith.constant 143 : index
    %440 = memref.load %arg1[%c143] : memref<241xf32, #tpu.memory_space<smem>>
    %441 = vector.broadcast %440 : f32 to vector<8x128xf32>
    %442 = arith.mulf %232, %441 : vector<8x128xf32>
    %443 = arith.addf %439, %442 : vector<8x128xf32>
    %c153 = arith.constant 153 : index
    %444 = memref.load %arg1[%c153] : memref<241xf32, #tpu.memory_space<smem>>
    %445 = vector.broadcast %444 : f32 to vector<8x128xf32>
    %446 = arith.mulf %256, %445 : vector<8x128xf32>
    %447 = arith.addf %443, %446 : vector<8x128xf32>
    %c163 = arith.constant 163 : index
    %448 = memref.load %arg1[%c163] : memref<241xf32, #tpu.memory_space<smem>>
    %449 = vector.broadcast %448 : f32 to vector<8x128xf32>
    %450 = arith.mulf %280, %449 : vector<8x128xf32>
    %451 = arith.addf %447, %450 : vector<8x128xf32>
    %c173 = arith.constant 173 : index
    %452 = memref.load %arg1[%c173] : memref<241xf32, #tpu.memory_space<smem>>
    %453 = vector.broadcast %452 : f32 to vector<8x128xf32>
    %454 = arith.addf %451, %453 : vector<8x128xf32>
    %cst_19 = arith.constant 0.000000e+00 : f32
    %455 = vector.broadcast %cst_19 : f32 to vector<8x128xf32>
    %456 = arith.maximumf %454, %455 : vector<8x128xf32>
    %c74 = arith.constant 74 : index
    %457 = memref.load %arg1[%c74] : memref<241xf32, #tpu.memory_space<smem>>
    %458 = vector.broadcast %457 : f32 to vector<8x128xf32>
    %459 = arith.mulf %64, %458 : vector<8x128xf32>
    %c84 = arith.constant 84 : index
    %460 = memref.load %arg1[%c84] : memref<241xf32, #tpu.memory_space<smem>>
    %461 = vector.broadcast %460 : f32 to vector<8x128xf32>
    %462 = arith.mulf %88, %461 : vector<8x128xf32>
    %463 = arith.addf %459, %462 : vector<8x128xf32>
    %c94 = arith.constant 94 : index
    %464 = memref.load %arg1[%c94] : memref<241xf32, #tpu.memory_space<smem>>
    %465 = vector.broadcast %464 : f32 to vector<8x128xf32>
    %466 = arith.mulf %112, %465 : vector<8x128xf32>
    %467 = arith.addf %463, %466 : vector<8x128xf32>
    %c104 = arith.constant 104 : index
    %468 = memref.load %arg1[%c104] : memref<241xf32, #tpu.memory_space<smem>>
    %469 = vector.broadcast %468 : f32 to vector<8x128xf32>
    %470 = arith.mulf %136, %469 : vector<8x128xf32>
    %471 = arith.addf %467, %470 : vector<8x128xf32>
    %c114 = arith.constant 114 : index
    %472 = memref.load %arg1[%c114] : memref<241xf32, #tpu.memory_space<smem>>
    %473 = vector.broadcast %472 : f32 to vector<8x128xf32>
    %474 = arith.mulf %160, %473 : vector<8x128xf32>
    %475 = arith.addf %471, %474 : vector<8x128xf32>
    %c124 = arith.constant 124 : index
    %476 = memref.load %arg1[%c124] : memref<241xf32, #tpu.memory_space<smem>>
    %477 = vector.broadcast %476 : f32 to vector<8x128xf32>
    %478 = arith.mulf %184, %477 : vector<8x128xf32>
    %479 = arith.addf %475, %478 : vector<8x128xf32>
    %c134 = arith.constant 134 : index
    %480 = memref.load %arg1[%c134] : memref<241xf32, #tpu.memory_space<smem>>
    %481 = vector.broadcast %480 : f32 to vector<8x128xf32>
    %482 = arith.mulf %208, %481 : vector<8x128xf32>
    %483 = arith.addf %479, %482 : vector<8x128xf32>
    %c144 = arith.constant 144 : index
    %484 = memref.load %arg1[%c144] : memref<241xf32, #tpu.memory_space<smem>>
    %485 = vector.broadcast %484 : f32 to vector<8x128xf32>
    %486 = arith.mulf %232, %485 : vector<8x128xf32>
    %487 = arith.addf %483, %486 : vector<8x128xf32>
    %c154 = arith.constant 154 : index
    %488 = memref.load %arg1[%c154] : memref<241xf32, #tpu.memory_space<smem>>
    %489 = vector.broadcast %488 : f32 to vector<8x128xf32>
    %490 = arith.mulf %256, %489 : vector<8x128xf32>
    %491 = arith.addf %487, %490 : vector<8x128xf32>
    %c164 = arith.constant 164 : index
    %492 = memref.load %arg1[%c164] : memref<241xf32, #tpu.memory_space<smem>>
    %493 = vector.broadcast %492 : f32 to vector<8x128xf32>
    %494 = arith.mulf %280, %493 : vector<8x128xf32>
    %495 = arith.addf %491, %494 : vector<8x128xf32>
    %c174 = arith.constant 174 : index
    %496 = memref.load %arg1[%c174] : memref<241xf32, #tpu.memory_space<smem>>
    %497 = vector.broadcast %496 : f32 to vector<8x128xf32>
    %498 = arith.addf %495, %497 : vector<8x128xf32>
    %cst_20 = arith.constant 0.000000e+00 : f32
    %499 = vector.broadcast %cst_20 : f32 to vector<8x128xf32>
    %500 = arith.maximumf %498, %499 : vector<8x128xf32>
    %c75 = arith.constant 75 : index
    %501 = memref.load %arg1[%c75] : memref<241xf32, #tpu.memory_space<smem>>
    %502 = vector.broadcast %501 : f32 to vector<8x128xf32>
    %503 = arith.mulf %64, %502 : vector<8x128xf32>
    %c85 = arith.constant 85 : index
    %504 = memref.load %arg1[%c85] : memref<241xf32, #tpu.memory_space<smem>>
    %505 = vector.broadcast %504 : f32 to vector<8x128xf32>
    %506 = arith.mulf %88, %505 : vector<8x128xf32>
    %507 = arith.addf %503, %506 : vector<8x128xf32>
    %c95 = arith.constant 95 : index
    %508 = memref.load %arg1[%c95] : memref<241xf32, #tpu.memory_space<smem>>
    %509 = vector.broadcast %508 : f32 to vector<8x128xf32>
    %510 = arith.mulf %112, %509 : vector<8x128xf32>
    %511 = arith.addf %507, %510 : vector<8x128xf32>
    %c105 = arith.constant 105 : index
    %512 = memref.load %arg1[%c105] : memref<241xf32, #tpu.memory_space<smem>>
    %513 = vector.broadcast %512 : f32 to vector<8x128xf32>
    %514 = arith.mulf %136, %513 : vector<8x128xf32>
    %515 = arith.addf %511, %514 : vector<8x128xf32>
    %c115 = arith.constant 115 : index
    %516 = memref.load %arg1[%c115] : memref<241xf32, #tpu.memory_space<smem>>
    %517 = vector.broadcast %516 : f32 to vector<8x128xf32>
    %518 = arith.mulf %160, %517 : vector<8x128xf32>
    %519 = arith.addf %515, %518 : vector<8x128xf32>
    %c125 = arith.constant 125 : index
    %520 = memref.load %arg1[%c125] : memref<241xf32, #tpu.memory_space<smem>>
    %521 = vector.broadcast %520 : f32 to vector<8x128xf32>
    %522 = arith.mulf %184, %521 : vector<8x128xf32>
    %523 = arith.addf %519, %522 : vector<8x128xf32>
    %c135 = arith.constant 135 : index
    %524 = memref.load %arg1[%c135] : memref<241xf32, #tpu.memory_space<smem>>
    %525 = vector.broadcast %524 : f32 to vector<8x128xf32>
    %526 = arith.mulf %208, %525 : vector<8x128xf32>
    %527 = arith.addf %523, %526 : vector<8x128xf32>
    %c145 = arith.constant 145 : index
    %528 = memref.load %arg1[%c145] : memref<241xf32, #tpu.memory_space<smem>>
    %529 = vector.broadcast %528 : f32 to vector<8x128xf32>
    %530 = arith.mulf %232, %529 : vector<8x128xf32>
    %531 = arith.addf %527, %530 : vector<8x128xf32>
    %c155 = arith.constant 155 : index
    %532 = memref.load %arg1[%c155] : memref<241xf32, #tpu.memory_space<smem>>
    %533 = vector.broadcast %532 : f32 to vector<8x128xf32>
    %534 = arith.mulf %256, %533 : vector<8x128xf32>
    %535 = arith.addf %531, %534 : vector<8x128xf32>
    %c165 = arith.constant 165 : index
    %536 = memref.load %arg1[%c165] : memref<241xf32, #tpu.memory_space<smem>>
    %537 = vector.broadcast %536 : f32 to vector<8x128xf32>
    %538 = arith.mulf %280, %537 : vector<8x128xf32>
    %539 = arith.addf %535, %538 : vector<8x128xf32>
    %c175 = arith.constant 175 : index
    %540 = memref.load %arg1[%c175] : memref<241xf32, #tpu.memory_space<smem>>
    %541 = vector.broadcast %540 : f32 to vector<8x128xf32>
    %542 = arith.addf %539, %541 : vector<8x128xf32>
    %cst_21 = arith.constant 0.000000e+00 : f32
    %543 = vector.broadcast %cst_21 : f32 to vector<8x128xf32>
    %544 = arith.maximumf %542, %543 : vector<8x128xf32>
    %c76 = arith.constant 76 : index
    %545 = memref.load %arg1[%c76] : memref<241xf32, #tpu.memory_space<smem>>
    %546 = vector.broadcast %545 : f32 to vector<8x128xf32>
    %547 = arith.mulf %64, %546 : vector<8x128xf32>
    %c86 = arith.constant 86 : index
    %548 = memref.load %arg1[%c86] : memref<241xf32, #tpu.memory_space<smem>>
    %549 = vector.broadcast %548 : f32 to vector<8x128xf32>
    %550 = arith.mulf %88, %549 : vector<8x128xf32>
    %551 = arith.addf %547, %550 : vector<8x128xf32>
    %c96 = arith.constant 96 : index
    %552 = memref.load %arg1[%c96] : memref<241xf32, #tpu.memory_space<smem>>
    %553 = vector.broadcast %552 : f32 to vector<8x128xf32>
    %554 = arith.mulf %112, %553 : vector<8x128xf32>
    %555 = arith.addf %551, %554 : vector<8x128xf32>
    %c106 = arith.constant 106 : index
    %556 = memref.load %arg1[%c106] : memref<241xf32, #tpu.memory_space<smem>>
    %557 = vector.broadcast %556 : f32 to vector<8x128xf32>
    %558 = arith.mulf %136, %557 : vector<8x128xf32>
    %559 = arith.addf %555, %558 : vector<8x128xf32>
    %c116 = arith.constant 116 : index
    %560 = memref.load %arg1[%c116] : memref<241xf32, #tpu.memory_space<smem>>
    %561 = vector.broadcast %560 : f32 to vector<8x128xf32>
    %562 = arith.mulf %160, %561 : vector<8x128xf32>
    %563 = arith.addf %559, %562 : vector<8x128xf32>
    %c126 = arith.constant 126 : index
    %564 = memref.load %arg1[%c126] : memref<241xf32, #tpu.memory_space<smem>>
    %565 = vector.broadcast %564 : f32 to vector<8x128xf32>
    %566 = arith.mulf %184, %565 : vector<8x128xf32>
    %567 = arith.addf %563, %566 : vector<8x128xf32>
    %c136 = arith.constant 136 : index
    %568 = memref.load %arg1[%c136] : memref<241xf32, #tpu.memory_space<smem>>
    %569 = vector.broadcast %568 : f32 to vector<8x128xf32>
    %570 = arith.mulf %208, %569 : vector<8x128xf32>
    %571 = arith.addf %567, %570 : vector<8x128xf32>
    %c146 = arith.constant 146 : index
    %572 = memref.load %arg1[%c146] : memref<241xf32, #tpu.memory_space<smem>>
    %573 = vector.broadcast %572 : f32 to vector<8x128xf32>
    %574 = arith.mulf %232, %573 : vector<8x128xf32>
    %575 = arith.addf %571, %574 : vector<8x128xf32>
    %c156 = arith.constant 156 : index
    %576 = memref.load %arg1[%c156] : memref<241xf32, #tpu.memory_space<smem>>
    %577 = vector.broadcast %576 : f32 to vector<8x128xf32>
    %578 = arith.mulf %256, %577 : vector<8x128xf32>
    %579 = arith.addf %575, %578 : vector<8x128xf32>
    %c166 = arith.constant 166 : index
    %580 = memref.load %arg1[%c166] : memref<241xf32, #tpu.memory_space<smem>>
    %581 = vector.broadcast %580 : f32 to vector<8x128xf32>
    %582 = arith.mulf %280, %581 : vector<8x128xf32>
    %583 = arith.addf %579, %582 : vector<8x128xf32>
    %c176 = arith.constant 176 : index
    %584 = memref.load %arg1[%c176] : memref<241xf32, #tpu.memory_space<smem>>
    %585 = vector.broadcast %584 : f32 to vector<8x128xf32>
    %586 = arith.addf %583, %585 : vector<8x128xf32>
    %cst_22 = arith.constant 0.000000e+00 : f32
    %587 = vector.broadcast %cst_22 : f32 to vector<8x128xf32>
    %588 = arith.maximumf %586, %587 : vector<8x128xf32>
    %c77 = arith.constant 77 : index
    %589 = memref.load %arg1[%c77] : memref<241xf32, #tpu.memory_space<smem>>
    %590 = vector.broadcast %589 : f32 to vector<8x128xf32>
    %591 = arith.mulf %64, %590 : vector<8x128xf32>
    %c87 = arith.constant 87 : index
    %592 = memref.load %arg1[%c87] : memref<241xf32, #tpu.memory_space<smem>>
    %593 = vector.broadcast %592 : f32 to vector<8x128xf32>
    %594 = arith.mulf %88, %593 : vector<8x128xf32>
    %595 = arith.addf %591, %594 : vector<8x128xf32>
    %c97 = arith.constant 97 : index
    %596 = memref.load %arg1[%c97] : memref<241xf32, #tpu.memory_space<smem>>
    %597 = vector.broadcast %596 : f32 to vector<8x128xf32>
    %598 = arith.mulf %112, %597 : vector<8x128xf32>
    %599 = arith.addf %595, %598 : vector<8x128xf32>
    %c107 = arith.constant 107 : index
    %600 = memref.load %arg1[%c107] : memref<241xf32, #tpu.memory_space<smem>>
    %601 = vector.broadcast %600 : f32 to vector<8x128xf32>
    %602 = arith.mulf %136, %601 : vector<8x128xf32>
    %603 = arith.addf %599, %602 : vector<8x128xf32>
    %c117 = arith.constant 117 : index
    %604 = memref.load %arg1[%c117] : memref<241xf32, #tpu.memory_space<smem>>
    %605 = vector.broadcast %604 : f32 to vector<8x128xf32>
    %606 = arith.mulf %160, %605 : vector<8x128xf32>
    %607 = arith.addf %603, %606 : vector<8x128xf32>
    %c127 = arith.constant 127 : index
    %608 = memref.load %arg1[%c127] : memref<241xf32, #tpu.memory_space<smem>>
    %609 = vector.broadcast %608 : f32 to vector<8x128xf32>
    %610 = arith.mulf %184, %609 : vector<8x128xf32>
    %611 = arith.addf %607, %610 : vector<8x128xf32>
    %c137 = arith.constant 137 : index
    %612 = memref.load %arg1[%c137] : memref<241xf32, #tpu.memory_space<smem>>
    %613 = vector.broadcast %612 : f32 to vector<8x128xf32>
    %614 = arith.mulf %208, %613 : vector<8x128xf32>
    %615 = arith.addf %611, %614 : vector<8x128xf32>
    %c147 = arith.constant 147 : index
    %616 = memref.load %arg1[%c147] : memref<241xf32, #tpu.memory_space<smem>>
    %617 = vector.broadcast %616 : f32 to vector<8x128xf32>
    %618 = arith.mulf %232, %617 : vector<8x128xf32>
    %619 = arith.addf %615, %618 : vector<8x128xf32>
    %c157 = arith.constant 157 : index
    %620 = memref.load %arg1[%c157] : memref<241xf32, #tpu.memory_space<smem>>
    %621 = vector.broadcast %620 : f32 to vector<8x128xf32>
    %622 = arith.mulf %256, %621 : vector<8x128xf32>
    %623 = arith.addf %619, %622 : vector<8x128xf32>
    %c167 = arith.constant 167 : index
    %624 = memref.load %arg1[%c167] : memref<241xf32, #tpu.memory_space<smem>>
    %625 = vector.broadcast %624 : f32 to vector<8x128xf32>
    %626 = arith.mulf %280, %625 : vector<8x128xf32>
    %627 = arith.addf %623, %626 : vector<8x128xf32>
    %c177 = arith.constant 177 : index
    %628 = memref.load %arg1[%c177] : memref<241xf32, #tpu.memory_space<smem>>
    %629 = vector.broadcast %628 : f32 to vector<8x128xf32>
    %630 = arith.addf %627, %629 : vector<8x128xf32>
    %cst_23 = arith.constant 0.000000e+00 : f32
    %631 = vector.broadcast %cst_23 : f32 to vector<8x128xf32>
    %632 = arith.maximumf %630, %631 : vector<8x128xf32>
    %c78 = arith.constant 78 : index
    %633 = memref.load %arg1[%c78] : memref<241xf32, #tpu.memory_space<smem>>
    %634 = vector.broadcast %633 : f32 to vector<8x128xf32>
    %635 = arith.mulf %64, %634 : vector<8x128xf32>
    %c88 = arith.constant 88 : index
    %636 = memref.load %arg1[%c88] : memref<241xf32, #tpu.memory_space<smem>>
    %637 = vector.broadcast %636 : f32 to vector<8x128xf32>
    %638 = arith.mulf %88, %637 : vector<8x128xf32>
    %639 = arith.addf %635, %638 : vector<8x128xf32>
    %c98 = arith.constant 98 : index
    %640 = memref.load %arg1[%c98] : memref<241xf32, #tpu.memory_space<smem>>
    %641 = vector.broadcast %640 : f32 to vector<8x128xf32>
    %642 = arith.mulf %112, %641 : vector<8x128xf32>
    %643 = arith.addf %639, %642 : vector<8x128xf32>
    %c108 = arith.constant 108 : index
    %644 = memref.load %arg1[%c108] : memref<241xf32, #tpu.memory_space<smem>>
    %645 = vector.broadcast %644 : f32 to vector<8x128xf32>
    %646 = arith.mulf %136, %645 : vector<8x128xf32>
    %647 = arith.addf %643, %646 : vector<8x128xf32>
    %c118 = arith.constant 118 : index
    %648 = memref.load %arg1[%c118] : memref<241xf32, #tpu.memory_space<smem>>
    %649 = vector.broadcast %648 : f32 to vector<8x128xf32>
    %650 = arith.mulf %160, %649 : vector<8x128xf32>
    %651 = arith.addf %647, %650 : vector<8x128xf32>
    %c128 = arith.constant 128 : index
    %652 = memref.load %arg1[%c128] : memref<241xf32, #tpu.memory_space<smem>>
    %653 = vector.broadcast %652 : f32 to vector<8x128xf32>
    %654 = arith.mulf %184, %653 : vector<8x128xf32>
    %655 = arith.addf %651, %654 : vector<8x128xf32>
    %c138 = arith.constant 138 : index
    %656 = memref.load %arg1[%c138] : memref<241xf32, #tpu.memory_space<smem>>
    %657 = vector.broadcast %656 : f32 to vector<8x128xf32>
    %658 = arith.mulf %208, %657 : vector<8x128xf32>
    %659 = arith.addf %655, %658 : vector<8x128xf32>
    %c148 = arith.constant 148 : index
    %660 = memref.load %arg1[%c148] : memref<241xf32, #tpu.memory_space<smem>>
    %661 = vector.broadcast %660 : f32 to vector<8x128xf32>
    %662 = arith.mulf %232, %661 : vector<8x128xf32>
    %663 = arith.addf %659, %662 : vector<8x128xf32>
    %c158 = arith.constant 158 : index
    %664 = memref.load %arg1[%c158] : memref<241xf32, #tpu.memory_space<smem>>
    %665 = vector.broadcast %664 : f32 to vector<8x128xf32>
    %666 = arith.mulf %256, %665 : vector<8x128xf32>
    %667 = arith.addf %663, %666 : vector<8x128xf32>
    %c168 = arith.constant 168 : index
    %668 = memref.load %arg1[%c168] : memref<241xf32, #tpu.memory_space<smem>>
    %669 = vector.broadcast %668 : f32 to vector<8x128xf32>
    %670 = arith.mulf %280, %669 : vector<8x128xf32>
    %671 = arith.addf %667, %670 : vector<8x128xf32>
    %c178 = arith.constant 178 : index
    %672 = memref.load %arg1[%c178] : memref<241xf32, #tpu.memory_space<smem>>
    %673 = vector.broadcast %672 : f32 to vector<8x128xf32>
    %674 = arith.addf %671, %673 : vector<8x128xf32>
    %cst_24 = arith.constant 0.000000e+00 : f32
    %675 = vector.broadcast %cst_24 : f32 to vector<8x128xf32>
    %676 = arith.maximumf %674, %675 : vector<8x128xf32>
    %c79 = arith.constant 79 : index
    %677 = memref.load %arg1[%c79] : memref<241xf32, #tpu.memory_space<smem>>
    %678 = vector.broadcast %677 : f32 to vector<8x128xf32>
    %679 = arith.mulf %64, %678 : vector<8x128xf32>
    %c89 = arith.constant 89 : index
    %680 = memref.load %arg1[%c89] : memref<241xf32, #tpu.memory_space<smem>>
    %681 = vector.broadcast %680 : f32 to vector<8x128xf32>
    %682 = arith.mulf %88, %681 : vector<8x128xf32>
    %683 = arith.addf %679, %682 : vector<8x128xf32>
    %c99 = arith.constant 99 : index
    %684 = memref.load %arg1[%c99] : memref<241xf32, #tpu.memory_space<smem>>
    %685 = vector.broadcast %684 : f32 to vector<8x128xf32>
    %686 = arith.mulf %112, %685 : vector<8x128xf32>
    %687 = arith.addf %683, %686 : vector<8x128xf32>
    %c109 = arith.constant 109 : index
    %688 = memref.load %arg1[%c109] : memref<241xf32, #tpu.memory_space<smem>>
    %689 = vector.broadcast %688 : f32 to vector<8x128xf32>
    %690 = arith.mulf %136, %689 : vector<8x128xf32>
    %691 = arith.addf %687, %690 : vector<8x128xf32>
    %c119 = arith.constant 119 : index
    %692 = memref.load %arg1[%c119] : memref<241xf32, #tpu.memory_space<smem>>
    %693 = vector.broadcast %692 : f32 to vector<8x128xf32>
    %694 = arith.mulf %160, %693 : vector<8x128xf32>
    %695 = arith.addf %691, %694 : vector<8x128xf32>
    %c129 = arith.constant 129 : index
    %696 = memref.load %arg1[%c129] : memref<241xf32, #tpu.memory_space<smem>>
    %697 = vector.broadcast %696 : f32 to vector<8x128xf32>
    %698 = arith.mulf %184, %697 : vector<8x128xf32>
    %699 = arith.addf %695, %698 : vector<8x128xf32>
    %c139 = arith.constant 139 : index
    %700 = memref.load %arg1[%c139] : memref<241xf32, #tpu.memory_space<smem>>
    %701 = vector.broadcast %700 : f32 to vector<8x128xf32>
    %702 = arith.mulf %208, %701 : vector<8x128xf32>
    %703 = arith.addf %699, %702 : vector<8x128xf32>
    %c149 = arith.constant 149 : index
    %704 = memref.load %arg1[%c149] : memref<241xf32, #tpu.memory_space<smem>>
    %705 = vector.broadcast %704 : f32 to vector<8x128xf32>
    %706 = arith.mulf %232, %705 : vector<8x128xf32>
    %707 = arith.addf %703, %706 : vector<8x128xf32>
    %c159 = arith.constant 159 : index
    %708 = memref.load %arg1[%c159] : memref<241xf32, #tpu.memory_space<smem>>
    %709 = vector.broadcast %708 : f32 to vector<8x128xf32>
    %710 = arith.mulf %256, %709 : vector<8x128xf32>
    %711 = arith.addf %707, %710 : vector<8x128xf32>
    %c169 = arith.constant 169 : index
    %712 = memref.load %arg1[%c169] : memref<241xf32, #tpu.memory_space<smem>>
    %713 = vector.broadcast %712 : f32 to vector<8x128xf32>
    %714 = arith.mulf %280, %713 : vector<8x128xf32>
    %715 = arith.addf %711, %714 : vector<8x128xf32>
    %c179 = arith.constant 179 : index
    %716 = memref.load %arg1[%c179] : memref<241xf32, #tpu.memory_space<smem>>
    %717 = vector.broadcast %716 : f32 to vector<8x128xf32>
    %718 = arith.addf %715, %717 : vector<8x128xf32>
    %cst_25 = arith.constant 0.000000e+00 : f32
    %719 = vector.broadcast %cst_25 : f32 to vector<8x128xf32>
    %720 = arith.maximumf %718, %719 : vector<8x128xf32>
    %c180 = arith.constant 180 : index
    %721 = memref.load %arg1[%c180] : memref<241xf32, #tpu.memory_space<smem>>
    %722 = vector.broadcast %721 : f32 to vector<8x128xf32>
    %723 = arith.mulf %324, %722 : vector<8x128xf32>
    %c185 = arith.constant 185 : index
    %724 = memref.load %arg1[%c185] : memref<241xf32, #tpu.memory_space<smem>>
    %725 = vector.broadcast %724 : f32 to vector<8x128xf32>
    %726 = arith.mulf %368, %725 : vector<8x128xf32>
    %727 = arith.addf %723, %726 : vector<8x128xf32>
    %c190 = arith.constant 190 : index
    %728 = memref.load %arg1[%c190] : memref<241xf32, #tpu.memory_space<smem>>
    %729 = vector.broadcast %728 : f32 to vector<8x128xf32>
    %730 = arith.mulf %412, %729 : vector<8x128xf32>
    %731 = arith.addf %727, %730 : vector<8x128xf32>
    %c195 = arith.constant 195 : index
    %732 = memref.load %arg1[%c195] : memref<241xf32, #tpu.memory_space<smem>>
    %733 = vector.broadcast %732 : f32 to vector<8x128xf32>
    %734 = arith.mulf %456, %733 : vector<8x128xf32>
    %735 = arith.addf %731, %734 : vector<8x128xf32>
    %c200 = arith.constant 200 : index
    %736 = memref.load %arg1[%c200] : memref<241xf32, #tpu.memory_space<smem>>
    %737 = vector.broadcast %736 : f32 to vector<8x128xf32>
    %738 = arith.mulf %500, %737 : vector<8x128xf32>
    %739 = arith.addf %735, %738 : vector<8x128xf32>
    %c205 = arith.constant 205 : index
    %740 = memref.load %arg1[%c205] : memref<241xf32, #tpu.memory_space<smem>>
    %741 = vector.broadcast %740 : f32 to vector<8x128xf32>
    %742 = arith.mulf %544, %741 : vector<8x128xf32>
    %743 = arith.addf %739, %742 : vector<8x128xf32>
    %c210 = arith.constant 210 : index
    %744 = memref.load %arg1[%c210] : memref<241xf32, #tpu.memory_space<smem>>
    %745 = vector.broadcast %744 : f32 to vector<8x128xf32>
    %746 = arith.mulf %588, %745 : vector<8x128xf32>
    %747 = arith.addf %743, %746 : vector<8x128xf32>
    %c215 = arith.constant 215 : index
    %748 = memref.load %arg1[%c215] : memref<241xf32, #tpu.memory_space<smem>>
    %749 = vector.broadcast %748 : f32 to vector<8x128xf32>
    %750 = arith.mulf %632, %749 : vector<8x128xf32>
    %751 = arith.addf %747, %750 : vector<8x128xf32>
    %c220 = arith.constant 220 : index
    %752 = memref.load %arg1[%c220] : memref<241xf32, #tpu.memory_space<smem>>
    %753 = vector.broadcast %752 : f32 to vector<8x128xf32>
    %754 = arith.mulf %676, %753 : vector<8x128xf32>
    %755 = arith.addf %751, %754 : vector<8x128xf32>
    %c225 = arith.constant 225 : index
    %756 = memref.load %arg1[%c225] : memref<241xf32, #tpu.memory_space<smem>>
    %757 = vector.broadcast %756 : f32 to vector<8x128xf32>
    %758 = arith.mulf %720, %757 : vector<8x128xf32>
    %759 = arith.addf %755, %758 : vector<8x128xf32>
    %c230 = arith.constant 230 : index
    %760 = memref.load %arg1[%c230] : memref<241xf32, #tpu.memory_space<smem>>
    %761 = vector.broadcast %760 : f32 to vector<8x128xf32>
    %762 = arith.addf %759, %761 : vector<8x128xf32>
    %cst_26 = arith.constant 0.000000e+00 : f32
    %763 = vector.broadcast %cst_26 : f32 to vector<8x128xf32>
    %764 = arith.maximumf %762, %763 : vector<8x128xf32>
    %c181 = arith.constant 181 : index
    %765 = memref.load %arg1[%c181] : memref<241xf32, #tpu.memory_space<smem>>
    %766 = vector.broadcast %765 : f32 to vector<8x128xf32>
    %767 = arith.mulf %324, %766 : vector<8x128xf32>
    %c186 = arith.constant 186 : index
    %768 = memref.load %arg1[%c186] : memref<241xf32, #tpu.memory_space<smem>>
    %769 = vector.broadcast %768 : f32 to vector<8x128xf32>
    %770 = arith.mulf %368, %769 : vector<8x128xf32>
    %771 = arith.addf %767, %770 : vector<8x128xf32>
    %c191 = arith.constant 191 : index
    %772 = memref.load %arg1[%c191] : memref<241xf32, #tpu.memory_space<smem>>
    %773 = vector.broadcast %772 : f32 to vector<8x128xf32>
    %774 = arith.mulf %412, %773 : vector<8x128xf32>
    %775 = arith.addf %771, %774 : vector<8x128xf32>
    %c196 = arith.constant 196 : index
    %776 = memref.load %arg1[%c196] : memref<241xf32, #tpu.memory_space<smem>>
    %777 = vector.broadcast %776 : f32 to vector<8x128xf32>
    %778 = arith.mulf %456, %777 : vector<8x128xf32>
    %779 = arith.addf %775, %778 : vector<8x128xf32>
    %c201 = arith.constant 201 : index
    %780 = memref.load %arg1[%c201] : memref<241xf32, #tpu.memory_space<smem>>
    %781 = vector.broadcast %780 : f32 to vector<8x128xf32>
    %782 = arith.mulf %500, %781 : vector<8x128xf32>
    %783 = arith.addf %779, %782 : vector<8x128xf32>
    %c206 = arith.constant 206 : index
    %784 = memref.load %arg1[%c206] : memref<241xf32, #tpu.memory_space<smem>>
    %785 = vector.broadcast %784 : f32 to vector<8x128xf32>
    %786 = arith.mulf %544, %785 : vector<8x128xf32>
    %787 = arith.addf %783, %786 : vector<8x128xf32>
    %c211 = arith.constant 211 : index
    %788 = memref.load %arg1[%c211] : memref<241xf32, #tpu.memory_space<smem>>
    %789 = vector.broadcast %788 : f32 to vector<8x128xf32>
    %790 = arith.mulf %588, %789 : vector<8x128xf32>
    %791 = arith.addf %787, %790 : vector<8x128xf32>
    %c216 = arith.constant 216 : index
    %792 = memref.load %arg1[%c216] : memref<241xf32, #tpu.memory_space<smem>>
    %793 = vector.broadcast %792 : f32 to vector<8x128xf32>
    %794 = arith.mulf %632, %793 : vector<8x128xf32>
    %795 = arith.addf %791, %794 : vector<8x128xf32>
    %c221 = arith.constant 221 : index
    %796 = memref.load %arg1[%c221] : memref<241xf32, #tpu.memory_space<smem>>
    %797 = vector.broadcast %796 : f32 to vector<8x128xf32>
    %798 = arith.mulf %676, %797 : vector<8x128xf32>
    %799 = arith.addf %795, %798 : vector<8x128xf32>
    %c226 = arith.constant 226 : index
    %800 = memref.load %arg1[%c226] : memref<241xf32, #tpu.memory_space<smem>>
    %801 = vector.broadcast %800 : f32 to vector<8x128xf32>
    %802 = arith.mulf %720, %801 : vector<8x128xf32>
    %803 = arith.addf %799, %802 : vector<8x128xf32>
    %c231 = arith.constant 231 : index
    %804 = memref.load %arg1[%c231] : memref<241xf32, #tpu.memory_space<smem>>
    %805 = vector.broadcast %804 : f32 to vector<8x128xf32>
    %806 = arith.addf %803, %805 : vector<8x128xf32>
    %cst_27 = arith.constant 0.000000e+00 : f32
    %807 = vector.broadcast %cst_27 : f32 to vector<8x128xf32>
    %808 = arith.maximumf %806, %807 : vector<8x128xf32>
    %c182 = arith.constant 182 : index
    %809 = memref.load %arg1[%c182] : memref<241xf32, #tpu.memory_space<smem>>
    %810 = vector.broadcast %809 : f32 to vector<8x128xf32>
    %811 = arith.mulf %324, %810 : vector<8x128xf32>
    %c187 = arith.constant 187 : index
    %812 = memref.load %arg1[%c187] : memref<241xf32, #tpu.memory_space<smem>>
    %813 = vector.broadcast %812 : f32 to vector<8x128xf32>
    %814 = arith.mulf %368, %813 : vector<8x128xf32>
    %815 = arith.addf %811, %814 : vector<8x128xf32>
    %c192 = arith.constant 192 : index
    %816 = memref.load %arg1[%c192] : memref<241xf32, #tpu.memory_space<smem>>
    %817 = vector.broadcast %816 : f32 to vector<8x128xf32>
    %818 = arith.mulf %412, %817 : vector<8x128xf32>
    %819 = arith.addf %815, %818 : vector<8x128xf32>
    %c197 = arith.constant 197 : index
    %820 = memref.load %arg1[%c197] : memref<241xf32, #tpu.memory_space<smem>>
    %821 = vector.broadcast %820 : f32 to vector<8x128xf32>
    %822 = arith.mulf %456, %821 : vector<8x128xf32>
    %823 = arith.addf %819, %822 : vector<8x128xf32>
    %c202 = arith.constant 202 : index
    %824 = memref.load %arg1[%c202] : memref<241xf32, #tpu.memory_space<smem>>
    %825 = vector.broadcast %824 : f32 to vector<8x128xf32>
    %826 = arith.mulf %500, %825 : vector<8x128xf32>
    %827 = arith.addf %823, %826 : vector<8x128xf32>
    %c207 = arith.constant 207 : index
    %828 = memref.load %arg1[%c207] : memref<241xf32, #tpu.memory_space<smem>>
    %829 = vector.broadcast %828 : f32 to vector<8x128xf32>
    %830 = arith.mulf %544, %829 : vector<8x128xf32>
    %831 = arith.addf %827, %830 : vector<8x128xf32>
    %c212 = arith.constant 212 : index
    %832 = memref.load %arg1[%c212] : memref<241xf32, #tpu.memory_space<smem>>
    %833 = vector.broadcast %832 : f32 to vector<8x128xf32>
    %834 = arith.mulf %588, %833 : vector<8x128xf32>
    %835 = arith.addf %831, %834 : vector<8x128xf32>
    %c217 = arith.constant 217 : index
    %836 = memref.load %arg1[%c217] : memref<241xf32, #tpu.memory_space<smem>>
    %837 = vector.broadcast %836 : f32 to vector<8x128xf32>
    %838 = arith.mulf %632, %837 : vector<8x128xf32>
    %839 = arith.addf %835, %838 : vector<8x128xf32>
    %c222 = arith.constant 222 : index
    %840 = memref.load %arg1[%c222] : memref<241xf32, #tpu.memory_space<smem>>
    %841 = vector.broadcast %840 : f32 to vector<8x128xf32>
    %842 = arith.mulf %676, %841 : vector<8x128xf32>
    %843 = arith.addf %839, %842 : vector<8x128xf32>
    %c227 = arith.constant 227 : index
    %844 = memref.load %arg1[%c227] : memref<241xf32, #tpu.memory_space<smem>>
    %845 = vector.broadcast %844 : f32 to vector<8x128xf32>
    %846 = arith.mulf %720, %845 : vector<8x128xf32>
    %847 = arith.addf %843, %846 : vector<8x128xf32>
    %c232 = arith.constant 232 : index
    %848 = memref.load %arg1[%c232] : memref<241xf32, #tpu.memory_space<smem>>
    %849 = vector.broadcast %848 : f32 to vector<8x128xf32>
    %850 = arith.addf %847, %849 : vector<8x128xf32>
    %cst_28 = arith.constant 0.000000e+00 : f32
    %851 = vector.broadcast %cst_28 : f32 to vector<8x128xf32>
    %852 = arith.maximumf %850, %851 : vector<8x128xf32>
    %c183 = arith.constant 183 : index
    %853 = memref.load %arg1[%c183] : memref<241xf32, #tpu.memory_space<smem>>
    %854 = vector.broadcast %853 : f32 to vector<8x128xf32>
    %855 = arith.mulf %324, %854 : vector<8x128xf32>
    %c188 = arith.constant 188 : index
    %856 = memref.load %arg1[%c188] : memref<241xf32, #tpu.memory_space<smem>>
    %857 = vector.broadcast %856 : f32 to vector<8x128xf32>
    %858 = arith.mulf %368, %857 : vector<8x128xf32>
    %859 = arith.addf %855, %858 : vector<8x128xf32>
    %c193 = arith.constant 193 : index
    %860 = memref.load %arg1[%c193] : memref<241xf32, #tpu.memory_space<smem>>
    %861 = vector.broadcast %860 : f32 to vector<8x128xf32>
    %862 = arith.mulf %412, %861 : vector<8x128xf32>
    %863 = arith.addf %859, %862 : vector<8x128xf32>
    %c198 = arith.constant 198 : index
    %864 = memref.load %arg1[%c198] : memref<241xf32, #tpu.memory_space<smem>>
    %865 = vector.broadcast %864 : f32 to vector<8x128xf32>
    %866 = arith.mulf %456, %865 : vector<8x128xf32>
    %867 = arith.addf %863, %866 : vector<8x128xf32>
    %c203 = arith.constant 203 : index
    %868 = memref.load %arg1[%c203] : memref<241xf32, #tpu.memory_space<smem>>
    %869 = vector.broadcast %868 : f32 to vector<8x128xf32>
    %870 = arith.mulf %500, %869 : vector<8x128xf32>
    %871 = arith.addf %867, %870 : vector<8x128xf32>
    %c208 = arith.constant 208 : index
    %872 = memref.load %arg1[%c208] : memref<241xf32, #tpu.memory_space<smem>>
    %873 = vector.broadcast %872 : f32 to vector<8x128xf32>
    %874 = arith.mulf %544, %873 : vector<8x128xf32>
    %875 = arith.addf %871, %874 : vector<8x128xf32>
    %c213 = arith.constant 213 : index
    %876 = memref.load %arg1[%c213] : memref<241xf32, #tpu.memory_space<smem>>
    %877 = vector.broadcast %876 : f32 to vector<8x128xf32>
    %878 = arith.mulf %588, %877 : vector<8x128xf32>
    %879 = arith.addf %875, %878 : vector<8x128xf32>
    %c218 = arith.constant 218 : index
    %880 = memref.load %arg1[%c218] : memref<241xf32, #tpu.memory_space<smem>>
    %881 = vector.broadcast %880 : f32 to vector<8x128xf32>
    %882 = arith.mulf %632, %881 : vector<8x128xf32>
    %883 = arith.addf %879, %882 : vector<8x128xf32>
    %c223 = arith.constant 223 : index
    %884 = memref.load %arg1[%c223] : memref<241xf32, #tpu.memory_space<smem>>
    %885 = vector.broadcast %884 : f32 to vector<8x128xf32>
    %886 = arith.mulf %676, %885 : vector<8x128xf32>
    %887 = arith.addf %883, %886 : vector<8x128xf32>
    %c228 = arith.constant 228 : index
    %888 = memref.load %arg1[%c228] : memref<241xf32, #tpu.memory_space<smem>>
    %889 = vector.broadcast %888 : f32 to vector<8x128xf32>
    %890 = arith.mulf %720, %889 : vector<8x128xf32>
    %891 = arith.addf %887, %890 : vector<8x128xf32>
    %c233 = arith.constant 233 : index
    %892 = memref.load %arg1[%c233] : memref<241xf32, #tpu.memory_space<smem>>
    %893 = vector.broadcast %892 : f32 to vector<8x128xf32>
    %894 = arith.addf %891, %893 : vector<8x128xf32>
    %cst_29 = arith.constant 0.000000e+00 : f32
    %895 = vector.broadcast %cst_29 : f32 to vector<8x128xf32>
    %896 = arith.maximumf %894, %895 : vector<8x128xf32>
    %c184 = arith.constant 184 : index
    %897 = memref.load %arg1[%c184] : memref<241xf32, #tpu.memory_space<smem>>
    %898 = vector.broadcast %897 : f32 to vector<8x128xf32>
    %899 = arith.mulf %324, %898 : vector<8x128xf32>
    %c189 = arith.constant 189 : index
    %900 = memref.load %arg1[%c189] : memref<241xf32, #tpu.memory_space<smem>>
    %901 = vector.broadcast %900 : f32 to vector<8x128xf32>
    %902 = arith.mulf %368, %901 : vector<8x128xf32>
    %903 = arith.addf %899, %902 : vector<8x128xf32>
    %c194 = arith.constant 194 : index
    %904 = memref.load %arg1[%c194] : memref<241xf32, #tpu.memory_space<smem>>
    %905 = vector.broadcast %904 : f32 to vector<8x128xf32>
    %906 = arith.mulf %412, %905 : vector<8x128xf32>
    %907 = arith.addf %903, %906 : vector<8x128xf32>
    %c199 = arith.constant 199 : index
    %908 = memref.load %arg1[%c199] : memref<241xf32, #tpu.memory_space<smem>>
    %909 = vector.broadcast %908 : f32 to vector<8x128xf32>
    %910 = arith.mulf %456, %909 : vector<8x128xf32>
    %911 = arith.addf %907, %910 : vector<8x128xf32>
    %c204 = arith.constant 204 : index
    %912 = memref.load %arg1[%c204] : memref<241xf32, #tpu.memory_space<smem>>
    %913 = vector.broadcast %912 : f32 to vector<8x128xf32>
    %914 = arith.mulf %500, %913 : vector<8x128xf32>
    %915 = arith.addf %911, %914 : vector<8x128xf32>
    %c209 = arith.constant 209 : index
    %916 = memref.load %arg1[%c209] : memref<241xf32, #tpu.memory_space<smem>>
    %917 = vector.broadcast %916 : f32 to vector<8x128xf32>
    %918 = arith.mulf %544, %917 : vector<8x128xf32>
    %919 = arith.addf %915, %918 : vector<8x128xf32>
    %c214 = arith.constant 214 : index
    %920 = memref.load %arg1[%c214] : memref<241xf32, #tpu.memory_space<smem>>
    %921 = vector.broadcast %920 : f32 to vector<8x128xf32>
    %922 = arith.mulf %588, %921 : vector<8x128xf32>
    %923 = arith.addf %919, %922 : vector<8x128xf32>
    %c219 = arith.constant 219 : index
    %924 = memref.load %arg1[%c219] : memref<241xf32, #tpu.memory_space<smem>>
    %925 = vector.broadcast %924 : f32 to vector<8x128xf32>
    %926 = arith.mulf %632, %925 : vector<8x128xf32>
    %927 = arith.addf %923, %926 : vector<8x128xf32>
    %c224 = arith.constant 224 : index
    %928 = memref.load %arg1[%c224] : memref<241xf32, #tpu.memory_space<smem>>
    %929 = vector.broadcast %928 : f32 to vector<8x128xf32>
    %930 = arith.mulf %676, %929 : vector<8x128xf32>
    %931 = arith.addf %927, %930 : vector<8x128xf32>
    %c229 = arith.constant 229 : index
    %932 = memref.load %arg1[%c229] : memref<241xf32, #tpu.memory_space<smem>>
    %933 = vector.broadcast %932 : f32 to vector<8x128xf32>
    %934 = arith.mulf %720, %933 : vector<8x128xf32>
    %935 = arith.addf %931, %934 : vector<8x128xf32>
    %c234 = arith.constant 234 : index
    %936 = memref.load %arg1[%c234] : memref<241xf32, #tpu.memory_space<smem>>
    %937 = vector.broadcast %936 : f32 to vector<8x128xf32>
    %938 = arith.addf %935, %937 : vector<8x128xf32>
    %cst_30 = arith.constant 0.000000e+00 : f32
    %939 = vector.broadcast %cst_30 : f32 to vector<8x128xf32>
    %940 = arith.maximumf %938, %939 : vector<8x128xf32>
    %c235 = arith.constant 235 : index
    %941 = memref.load %arg1[%c235] : memref<241xf32, #tpu.memory_space<smem>>
    %942 = vector.broadcast %941 : f32 to vector<8x128xf32>
    %943 = arith.mulf %764, %942 : vector<8x128xf32>
    %c236 = arith.constant 236 : index
    %944 = memref.load %arg1[%c236] : memref<241xf32, #tpu.memory_space<smem>>
    %945 = vector.broadcast %944 : f32 to vector<8x128xf32>
    %946 = arith.mulf %808, %945 : vector<8x128xf32>
    %947 = arith.addf %943, %946 : vector<8x128xf32>
    %c237 = arith.constant 237 : index
    %948 = memref.load %arg1[%c237] : memref<241xf32, #tpu.memory_space<smem>>
    %949 = vector.broadcast %948 : f32 to vector<8x128xf32>
    %950 = arith.mulf %852, %949 : vector<8x128xf32>
    %951 = arith.addf %947, %950 : vector<8x128xf32>
    %c238 = arith.constant 238 : index
    %952 = memref.load %arg1[%c238] : memref<241xf32, #tpu.memory_space<smem>>
    %953 = vector.broadcast %952 : f32 to vector<8x128xf32>
    %954 = arith.mulf %896, %953 : vector<8x128xf32>
    %955 = arith.addf %951, %954 : vector<8x128xf32>
    %c239 = arith.constant 239 : index
    %956 = memref.load %arg1[%c239] : memref<241xf32, #tpu.memory_space<smem>>
    %957 = vector.broadcast %956 : f32 to vector<8x128xf32>
    %958 = arith.mulf %940, %957 : vector<8x128xf32>
    %959 = arith.addf %955, %958 : vector<8x128xf32>
    %c240 = arith.constant 240 : index
    %960 = memref.load %arg1[%c240] : memref<241xf32, #tpu.memory_space<smem>>
    %961 = vector.broadcast %960 : f32 to vector<8x128xf32>
    %962 = arith.addf %959, %961 : vector<8x128xf32>
    %cst_31 = arith.constant 0.000000e+00 : f32
    %963 = vector.broadcast %cst_31 : f32 to vector<8x128xf32>
    %964 = arith.maximumf %962, %963 : vector<8x128xf32>
    %c0_32 = arith.constant 0 : index
    %c0_33 = arith.constant 0 : index
    %965 = vector.load %arg3[%c0_32, %c0_33] : memref<8x128xf32, #tpu.memory_space<vmem>>, vector<8x128xf32>
    tpu.vector_store %arg3[%c0_32, %c0_33], %964 {strides = array<i32>} : memref<8x128xf32, #tpu.memory_space<vmem>>, vector<8x128xf32>,
    return
  }
  func.func @transform_0(%arg0: i32, %arg1: memref<241xf32, #tpu.memory_space<smem>>) -> (i32, i32) {
    %c0_i32 = arith.constant 0 : i32
    %c0_i32_0 = arith.constant 0 : i32
    return %c0_i32, %arg0 : i32, i32
  }
  func.func @transform_1(%arg0: i32, %arg1: memref<241xf32, #tpu.memory_space<smem>>) -> (i32, i32) {
    %c0_i32 = arith.constant 0 : i32
    %c0_i32_0 = arith.constant 0 : i32
    return %c0_i32, %arg0 : i32, i32
  }
}

</mosaic_0001>

<llo_original>
// kernel: tpu_custom_call.1
$region0: #{tpu_custom_call.1}
  #allocation0 [shape = 'u32[]', space=smem, size = 0x4, offset = 0x4, fixed_abs, tag = 'smem constant byte address 0x4 - core index']
  #allocation1 [shape = 'u32[144,128]{1,0:T(1,128)}', space=vmem, size = 0x12000, scoped, tag = 'internal scratch']
  #allocation2 [shape = 's32[1]{0}', space=sflag, size = 0x4, scoped, tag = 'scoped memory for tpu_custom_call.1']
  #allocation3 [shape = 'u8[1024]{0}', space=smem, size = 0x400, scoped, tag = 'prefetched SMEM operand 0']
  %s0 = inlined_call_operand.hbm [shape: f32[241], index: 0, kind: input, shape index: {}]
  %s1 = inlined_call_operand.hbm [shape: f32[8,128], index: 1, kind: input, shape index: {}]
  %s2 = inlined_call_operand.hbm [shape: f32[8,128], index: 2, kind: output, shape index: {}]
  %s3 = sld [smem:[#allocation0]]
  $region18: #{tpu_custom_call.1} parent=0
    _
  %s5 = ssub.s32 1, %s3
  %s6 = scalar_select 0, %s5, %s3
  %8 = dma.hbm_to_smem %s0, 32, [#allocation3], [#allocation2]
  %9 = dma.done [#allocation2], 32
  %10 = sfence
  $region1: #{tpu_custom_call.1} parent=0
    #allocation4 [shape = 'u8[4096]{0}', space=vmem, size = 0x1000, scoped, tag = 'input window, operand 1, single buffered']
    #allocation5 [shape = 's32[1]{0}', space=sflag, size = 0x4, scoped, tag = 'scoped memory for tpu_custom_call.1']
    #allocation6 [shape = 's32[1]{0}', space=sflag, size = 0x4, scoped, tag = 'scoped memory for tpu_custom_call.1']
    #allocation7 [shape = 'u8[4096]{0}', space=vmem, size = 0x1000, scoped, tag = 'output window, operand 0, single buffered']
    %11 = vsyncpa [#allocation5], 0
    %12 = vsyncpa [#allocation6], 0
    // Predicated region
    $region2: #{tpu_custom_call.1} parent=1 // pred_check
      _
    $region3: #{tpu_custom_call.1} parent=1 // pred_check_branch
      %14 = sbr.rel (0) target = $region5
    $region4: #{tpu_custom_call.1} parent=1 // pred_region
      %s16 = ssub.s32 128, 128
      %17 = vsyncadd [#allocation5], %s16
      %s19 = sshll.u32 [#allocation4], 4
      %s20 = int_to_ptr.vmem [resolvable:$true] %s19
      %22 = dma.hbm_to_vmem [thread:$0]  %s1, 128, %s20, [#allocation5]
    $region5: #{tpu_custom_call.1} parent=1 // pred_fallthru
      _
    // Predicated region
    $region6: #{tpu_custom_call.1} parent=1 // pred_check
      _
    $region7: #{tpu_custom_call.1} parent=1 // pred_check_branch
      %24 = sbr.rel (0) target = $region9
    $region8: #{tpu_custom_call.1} parent=1 // pred_region
      %25 = dma.done [#allocation5], 128
    $region9: #{tpu_custom_call.1} parent=1 // pred_fallthru
      _
    %v26 = vld [vmem:[#allocation4] sm:$0xff]
    %s27 = sld [smem:[#allocation3]]
    %v28 = vstv %s27
    %v29 = vmul.f32 %v26, %v28
    %s30 = sld [smem:[#allocation3 + $0x5]]
    %v31 = vstv %s30
    %v32 = vadd.f32 %v29, %v31
    %v33 = vmax.f32 %v32, 0.0
    %s34 = sld [smem:[#allocation3 + $0x1]]
    %v35 = vstv %s34
    %v36 = vmul.f32 %v26, %v35
    %s37 = sld [smem:[#allocation3 + $0x6]]
    %v38 = vstv %s37
    %v39 = vadd.f32 %v36, %v38
    %v40 = vmax.f32 %v39, 0.0
    %s41 = sld [smem:[#allocation3 + $0x2]]
    %v42 = vstv %s41
    %v43 = vmul.f32 %v26, %v42
    %s44 = sld [smem:[#allocation3 + $0x7]]
    %v45 = vstv %s44
    %v46 = vadd.f32 %v43, %v45
    %v47 = vmax.f32 %v46, 0.0
    %s48 = sld [smem:[#allocation3 + $0x3]]
    %v49 = vstv %s48
    %v50 = vmul.f32 %v26, %v49
    %s51 = sld [smem:[#allocation3 + $0x8]]
    %v52 = vstv %s51
    %v53 = vadd.f32 %v50, %v52
    %v54 = vmax.f32 %v53, 0.0
    %s55 = sld [smem:[#allocation3 + $0x4]]
    %v56 = vstv %s55
    %v57 = vmul.f32 %v26, %v56
    %s58 = sld [smem:[#allocation3 + $0x9]]
    %v59 = vstv %s58
    %v60 = vadd.f32 %v57, %v59
    %v61 = vmax.f32 %v60, 0.0
    %s62 = sld [smem:[#allocation3 + $0xa]]
    %v63 = vstv %s62
    %v64 = vmul.f32 %v33, %v63
    %s65 = sld [smem:[#allocation3 + $0x14]]
    %v66 = vstv %s65
    %v67 = vmul.f32 %v40, %v66
    %v68 = vadd.f32 %v64, %v67
    %s69 = sld [smem:[#allocation3 + $0x1e]]
    %v70 = vstv %s69
    %v71 = vmul.f32 %v47, %v70
    %v72 = vadd.f32 %v68, %v71
    %s73 = sld [smem:[#allocation3 + $0x28]]
    %v74 = vstv %s73
    %v75 = vmul.f32 %v54, %v74
    %v76 = vadd.f32 %v72, %v75
    %s77 = sld [smem:[#allocation3 + $0x32]]
    %v78 = vstv %s77
    %v79 = vmul.f32 %v61, %v78
    %v80 = vadd.f32 %v76, %v79
    %s81 = sld [smem:[#allocation3 + $0x3c]]
    %v82 = vstv %s81
    %v83 = vadd.f32 %v80, %v82
    %v84 = vmax.f32 %v83, 0.0
    %s85 = sld [smem:[#allocation3 + $0xb]]
    %v86 = vstv %s85
    %v87 = vmul.f32 %v33, %v86
    %s88 = sld [smem:[#allocation3 + $0x15]]
    %v89 = vstv %s88
    %v90 = vmul.f32 %v40, %v89
    %v91 = vadd.f32 %v87, %v90
    %s92 = sld [smem:[#allocation3 + $0x1f]]
    %v93 = vstv %s92
    %v94 = vmul.f32 %v47, %v93
    %v95 = vadd.f32 %v91, %v94
    %s96 = sld [smem:[#allocation3 + $0x29]]
    %v97 = vstv %s96
    %v98 = vmul.f32 %v54, %v97
    %v99 = vadd.f32 %v95, %v98
    %s100 = sld [smem:[#allocation3 + $0x33]]
    %v101 = vstv %s100
    %v102 = vmul.f32 %v61, %v101
    %v103 = vadd.f32 %v99, %v102
    %s104 = sld [smem:[#allocation3 + $0x3d]]
    %v105 = vstv %s104
    %v106 = vadd.f32 %v103, %v105
    %v107 = vmax.f32 %v106, 0.0
    %s108 = sld [smem:[#allocation3 + $0xc]]
    %v109 = vstv %s108
    %v110 = vmul.f32 %v33, %v109
    %s111 = sld [smem:[#allocation3 + $0x16]]
    %v112 = vstv %s111
    %v113 = vmul.f32 %v40, %v112
    %v114 = vadd.f32 %v110, %v113
    %s115 = sld [smem:[#allocation3 + $0x20]]
    %v116 = vstv %s115
    %v117 = vmul.f32 %v47, %v116
    %v118 = vadd.f32 %v114, %v117
    %s119 = sld [smem:[#allocation3 + $0x2a]]
    %v120 = vstv %s119
    %v121 = vmul.f32 %v54, %v120
    %v122 = vadd.f32 %v118, %v121
    %s123 = sld [smem:[#allocation3 + $0x34]]
    %v124 = vstv %s123
    %v125 = vmul.f32 %v61, %v124
    %v126 = vadd.f32 %v122, %v125
    %s127 = sld [smem:[#allocation3 + $0x3e]]
    %v128 = vstv %s127
    %v129 = vadd.f32 %v126, %v128
    %v130 = vmax.f32 %v129, 0.0
    %s131 = sld [smem:[#allocation3 + $0xd]]
    %v132 = vstv %s131
    %v133 = vmul.f32 %v33, %v132
    %s134 = sld [smem:[#allocation3 + $0x17]]
    %v135 = vstv %s134
    %v136 = vmul.f32 %v40, %v135
    %v137 = vadd.f32 %v133, %v136
    %s138 = sld [smem:[#allocation3 + $0x21]]
    %v139 = vstv %s138
    %v140 = vmul.f32 %v47, %v139
    %v141 = vadd.f32 %v137, %v140
    %s142 = sld [smem:[#allocation3 + $0x2b]]
    %v143 = vstv %s142
    %v144 = vmul.f32 %v54, %v143
    %v145 = vadd.f32 %v141, %v144
    %s146 = sld [smem:[#allocation3 + $0x35]]
    %v147 = vstv %s146
    %v148 = vmul.f32 %v61, %v147
    %v149 = vadd.f32 %v145, %v148
    %s150 = sld [smem:[#allocation3 + $0x3f]]
    %v151 = vstv %s150
    %v152 = vadd.f32 %v149, %v151
    %v153 = vmax.f32 %v152, 0.0
    %s154 = sld [smem:[#allocation3 + $0xe]]
    %v155 = vstv %s154
    %v156 = vmul.f32 %v33, %v155
    %s157 = sld [smem:[#allocation3 + $0x18]]
    %v158 = vstv %s157
    %v159 = vmul.f32 %v40, %v158
    %v160 = vadd.f32 %v156, %v159
    %s161 = sld [smem:[#allocation3 + $0x22]]
    %v162 = vstv %s161
    %v163 = vmul.f32 %v47, %v162
    %v164 = vadd.f32 %v160, %v163
    %s165 = sld [smem:[#allocation3 + $0x2c]]
    %v166 = vstv %s165
    %v167 = vmul.f32 %v54, %v166
    %v168 = vadd.f32 %v164, %v167
    %s169 = sld [smem:[#allocation3 + $0x36]]
    %v170 = vstv %s169
    %v171 = vmul.f32 %v61, %v170
    %v172 = vadd.f32 %v168, %v171
    %s173 = sld [smem:[#allocation3 + $0x40]]
    %v174 = vstv %s173
    %v175 = vadd.f32 %v172, %v174
    %v176 = vmax.f32 %v175, 0.0
    %s177 = sld [smem:[#allocation3 + $0xf]]
    %v178 = vstv %s177
    %v179 = vmul.f32 %v33, %v178
    %s180 = sld [smem:[#allocation3 + $0x19]]
    %v181 = vstv %s180
    %v182 = vmul.f32 %v40, %v181
    %v183 = vadd.f32 %v179, %v182
    %s184 = sld [smem:[#allocation3 + $0x23]]
    %v185 = vstv %s184
    %v186 = vmul.f32 %v47, %v185
    %v187 = vadd.f32 %v183, %v186
    %s188 = sld [smem:[#allocation3 + $0x2d]]
    %v189 = vstv %s188
    %v190 = vmul.f32 %v54, %v189
    %v191 = vadd.f32 %v187, %v190
    %s192 = sld [smem:[#allocation3 + $0x37]]
    %v193 = vstv %s192
    %v194 = vmul.f32 %v61, %v193
    %v195 = vadd.f32 %v191, %v194
    %s196 = sld [smem:[#allocation3 + $0x41]]
    %v197 = vstv %s196
    %v198 = vadd.f32 %v195, %v197
    %v199 = vmax.f32 %v198, 0.0
    %s200 = sld [smem:[#allocation3 + $0x10]]
    %v201 = vstv %s200
    %v202 = vmul.f32 %v33, %v201
    %s203 = sld [smem:[#allocation3 + $0x1a]]
    %v204 = vstv %s203
    %v205 = vmul.f32 %v40, %v204
    %v206 = vadd.f32 %v202, %v205
    %s207 = sld [smem:[#allocation3 + $0x24]]
    %v208 = vstv %s207
    %v209 = vmul.f32 %v47, %v208
    %v210 = vadd.f32 %v206, %v209
    %s211 = sld [smem:[#allocation3 + $0x2e]]
    %v212 = vstv %s211
    %v213 = vmul.f32 %v54, %v212
    %v214 = vadd.f32 %v210, %v213
    %s215 = sld [smem:[#allocation3 + $0x38]]
    %v216 = vstv %s215
    %v217 = vmul.f32 %v61, %v216
    %v218 = vadd.f32 %v214, %v217
    %s219 = sld [smem:[#allocation3 + $0x42]]
    %v220 = vstv %s219
    %v221 = vadd.f32 %v218, %v220
    %v222 = vmax.f32 %v221, 0.0
    %s223 = sld [smem:[#allocation3 + $0x11]]
    %v224 = vstv %s223
    %v225 = vmul.f32 %v33, %v224
    %s226 = sld [smem:[#allocation3 + $0x1b]]
    %v227 = vstv %s226
    %v228 = vmul.f32 %v40, %v227
    %v229 = vadd.f32 %v225, %v228
    %s230 = sld [smem:[#allocation3 + $0x25]]
    %v231 = vstv %s230
    %v232 = vmul.f32 %v47, %v231
    %v233 = vadd.f32 %v229, %v232
    %s234 = sld [smem:[#allocation3 + $0x2f]]
    %v235 = vstv %s234
    %v236 = vmul.f32 %v54, %v235
    %v237 = vadd.f32 %v233, %v236
    %s238 = sld [smem:[#allocation3 + $0x39]]
    %v239 = vstv %s238
    %v240 = vmul.f32 %v61, %v239
    %v241 = vadd.f32 %v237, %v240
    %s242 = sld [smem:[#allocation3 + $0x43]]
    %v243 = vstv %s242
    %v244 = vadd.f32 %v241, %v243
    %v245 = vmax.f32 %v244, 0.0
    %s246 = sld [smem:[#allocation3 + $0x12]]
    %v247 = vstv %s246
    %v248 = vmul.f32 %v33, %v247
    %s249 = sld [smem:[#allocation3 + $0x1c]]
    %v250 = vstv %s249
    %v251 = vmul.f32 %v40, %v250
    %v252 = vadd.f32 %v248, %v251
    %s253 = sld [smem:[#allocation3 + $0x26]]
    %v254 = vstv %s253
    %v255 = vmul.f32 %v47, %v254
    %v256 = vadd.f32 %v252, %v255
    %s257 = sld [smem:[#allocation3 + $0x30]]
    %v258 = vstv %s257
    %v259 = vmul.f32 %v54, %v258
    %v260 = vadd.f32 %v256, %v259
    %s261 = sld [smem:[#allocation3 + $0x3a]]
    %v262 = vstv %s261
    %v263 = vmul.f32 %v61, %v262
    %v264 = vadd.f32 %v260, %v263
    %s265 = sld [smem:[#allocation3 + $0x44]]
    %v266 = vstv %s265
    %v267 = vadd.f32 %v264, %v266
    %v268 = vmax.f32 %v267, 0.0
    %s269 = sld [smem:[#allocation3 + $0x13]]
    %v270 = vstv %s269
    %v271 = vmul.f32 %v33, %v270
    %s272 = sld [smem:[#allocation3 + $0x1d]]
    %v273 = vstv %s272
    %v274 = vmul.f32 %v40, %v273
    %v275 = vadd.f32 %v271, %v274
    %s276 = sld [smem:[#allocation3 + $0x27]]
    %v277 = vstv %s276
    %v278 = vmul.f32 %v47, %v277
    %v279 = vadd.f32 %v275, %v278
    %s280 = sld [smem:[#allocation3 + $0x31]]
    %v281 = vstv %s280
    %v282 = vmul.f32 %v54, %v281
    %v283 = vadd.f32 %v279, %v282
    %s284 = sld [smem:[#allocation3 + $0x3b]]
    %v285 = vstv %s284
    %v286 = vmul.f32 %v61, %v285
    %v287 = vadd.f32 %v283, %v286
    %s288 = sld [smem:[#allocation3 + $0x45]]
    %v289 = vstv %s288
    %v290 = vadd.f32 %v287, %v289
    %v291 = vmax.f32 %v290, 0.0
    %s292 = sld [smem:[#allocation3 + $0x46]]
    %v293 = vstv %s292
    %v294 = vmul.f32 %v84, %v293
    %s295 = sld [smem:[#allocation3 + $0x50]]
    %v296 = vstv %s295
    %v297 = vmul.f32 %v107, %v296
    %v298 = vadd.f32 %v294, %v297
    %s299 = sld [smem:[#allocation3 + $0x5a]]
    %v300 = vstv %s299
    %v301 = vmul.f32 %v130, %v300
    %v302 = vadd.f32 %v298, %v301
    %s303 = sld [smem:[#allocation3 + $0x64]]
    %v304 = vstv %s303
    %v305 = vmul.f32 %v153, %v304
    %v306 = vadd.f32 %v302, %v305
    %s307 = sld [smem:[#allocation3 + $0x6e]]
    %v308 = vstv %s307
    %v309 = vmul.f32 %v176, %v308
    %v310 = vadd.f32 %v306, %v309
    %s311 = sld [smem:[#allocation3 + $0x78]]
    %v312 = vstv %s311
    %v313 = vmul.f32 %v199, %v312
    %v314 = vadd.f32 %v310, %v313
    %s315 = sld [smem:[#allocation3 + $0x82]]
    %v316 = vstv %s315
    %v317 = vmul.f32 %v222, %v316
    %v318 = vadd.f32 %v314, %v317
    %s319 = sld [smem:[#allocation3 + $0x8c]]
    %v320 = vstv %s319
    %v321 = vmul.f32 %v245, %v320
    %v322 = vadd.f32 %v318, %v321
    %s323 = sld [smem:[#allocation3 + $0x96]]
    %v324 = vstv %s323
    %v325 = vmul.f32 %v268, %v324
    %v326 = vadd.f32 %v322, %v325
    %s327 = sld [smem:[#allocation3 + $0xa0]]
    %v328 = vstv %s327
    %v329 = vmul.f32 %v291, %v328
    %v330 = vadd.f32 %v326, %v329
    %s331 = sld [smem:[#allocation3 + $0xaa]]
    %v332 = vstv %s331
    %v333 = vadd.f32 %v330, %v332
    %v334 = vmax.f32 %v333, 0.0
    %s335 = sld [smem:[#allocation3 + $0x47]]
    %v336 = vstv %s335
    %v337 = vmul.f32 %v84, %v336
    %s338 = sld [smem:[#allocation3 + $0x51]]
    %v339 = vstv %s338
    %v340 = vmul.f32 %v107, %v339
    %v341 = vadd.f32 %v337, %v340
    %s342 = sld [smem:[#allocation3 + $0x5b]]
    %v343 = vstv %s342
    %v344 = vmul.f32 %v130, %v343
    %v345 = vadd.f32 %v341, %v344
    %s346 = sld [smem:[#allocation3 + $0x65]]
    %v347 = vstv %s346
    %v348 = vmul.f32 %v153, %v347
    %v349 = vadd.f32 %v345, %v348
    %s350 = sld [smem:[#allocation3 + $0x6f]]
    %v351 = vstv %s350
    %v352 = vmul.f32 %v176, %v351
    %v353 = vadd.f32 %v349, %v352
    %s354 = sld [smem:[#allocation3 + $0x79]]
    %v355 = vstv %s354
    %v356 = vmul.f32 %v199, %v355
    %v357 = vadd.f32 %v353, %v356
    %s358 = sld [smem:[#allocation3 + $0x83]]
    %v359 = vstv %s358
    %v360 = vmul.f32 %v222, %v359
    %v361 = vadd.f32 %v357, %v360
    %s362 = sld [smem:[#allocation3 + $0x8d]]
    %v363 = vstv %s362
    %v364 = vmul.f32 %v245, %v363
    %v365 = vadd.f32 %v361, %v364
    %s366 = sld [smem:[#allocation3 + $0x97]]
    %v367 = vstv %s366
    %v368 = vmul.f32 %v268, %v367
    %v369 = vadd.f32 %v365, %v368
    %s370 = sld [smem:[#allocation3 + $0xa1]]
    %v371 = vstv %s370
    %v372 = vmul.f32 %v291, %v371
    %v373 = vadd.f32 %v369, %v372
    %s374 = sld [smem:[#allocation3 + $0xab]]
    %v375 = vstv %s374
    %v376 = vadd.f32 %v373, %v375
    %v377 = vmax.f32 %v376, 0.0
    %s378 = sld [smem:[#allocation3 + $0x48]]
    %v379 = vstv %s378
    %v380 = vmul.f32 %v84, %v379
    %s381 = sld [smem:[#allocation3 + $0x52]]
    %v382 = vstv %s381
    %v383 = vmul.f32 %v107, %v382
    %v384 = vadd.f32 %v380, %v383
    %s385 = sld [smem:[#allocation3 + $0x5c]]
    %v386 = vstv %s385
    %v387 = vmul.f32 %v130, %v386
    %v388 = vadd.f32 %v384, %v387
    %s389 = sld [smem:[#allocation3 + $0x66]]
    %v390 = vstv %s389
    %v391 = vmul.f32 %v153, %v390
    %v392 = vadd.f32 %v388, %v391
    %s393 = sld [smem:[#allocation3 + $0x70]]
    %v394 = vstv %s393
    %v395 = vmul.f32 %v176, %v394
    %v396 = vadd.f32 %v392, %v395
    %s397 = sld [smem:[#allocation3 + $0x7a]]
    %v398 = vstv %s397
    %v399 = vmul.f32 %v199, %v398
    %v400 = vadd.f32 %v396, %v399
    %s401 = sld [smem:[#allocation3 + $0x84]]
    %v402 = vstv %s401
    %v403 = vmul.f32 %v222, %v402
    %v404 = vadd.f32 %v400, %v403
    %s405 = sld [smem:[#allocation3 + $0x8e]]
    %v406 = vstv %s405
    %v407 = vmul.f32 %v245, %v406
    %v408 = vadd.f32 %v404, %v407
    %s409 = sld [smem:[#allocation3 + $0x98]]
    %v410 = vstv %s409
    %v411 = vmul.f32 %v268, %v410
    %v412 = vadd.f32 %v408, %v411
    %s413 = sld [smem:[#allocation3 + $0xa2]]
    %v414 = vstv %s413
    %v415 = vmul.f32 %v291, %v414
    %v416 = vadd.f32 %v412, %v415
    %s417 = sld [smem:[#allocation3 + $0xac]]
    %v418 = vstv %s417
    %v419 = vadd.f32 %v416, %v418
    %v420 = vmax.f32 %v419, 0.0
    %s421 = sld [smem:[#allocation3 + $0x49]]
    %v422 = vstv %s421
    %v423 = vmul.f32 %v84, %v422
    %s424 = sld [smem:[#allocation3 + $0x53]]
    %v425 = vstv %s424
    %v426 = vmul.f32 %v107, %v425
    %v427 = vadd.f32 %v423, %v426
    %s428 = sld [smem:[#allocation3 + $0x5d]]
    %v429 = vstv %s428
    %v430 = vmul.f32 %v130, %v429
    %v431 = vadd.f32 %v427, %v430
    %s432 = sld [smem:[#allocation3 + $0x67]]
    %v433 = vstv %s432
    %v434 = vmul.f32 %v153, %v433
    %v435 = vadd.f32 %v431, %v434
    %s436 = sld [smem:[#allocation3 + $0x71]]
    %v437 = vstv %s436
    %v438 = vmul.f32 %v176, %v437
    %v439 = vadd.f32 %v435, %v438
    %s440 = sld [smem:[#allocation3 + $0x7b]]
    %v441 = vstv %s440
    %v442 = vmul.f32 %v199, %v441
    %v443 = vadd.f32 %v439, %v442
    %s444 = sld [smem:[#allocation3 + $0x85]]
    %v445 = vstv %s444
    %v446 = vmul.f32 %v222, %v445
    %v447 = vadd.f32 %v443, %v446
    %s448 = sld [smem:[#allocation3 + $0x8f]]
    %v449 = vstv %s448
    %v450 = vmul.f32 %v245, %v449
    %v451 = vadd.f32 %v447, %v450
    %s452 = sld [smem:[#allocation3 + $0x99]]
    %v453 = vstv %s452
    %v454 = vmul.f32 %v268, %v453
    %v455 = vadd.f32 %v451, %v454
    %s456 = sld [smem:[#allocation3 + $0xa3]]
    %v457 = vstv %s456
    %v458 = vmul.f32 %v291, %v457
    %v459 = vadd.f32 %v455, %v458
    %s460 = sld [smem:[#allocation3 + $0xad]]
    %v461 = vstv %s460
    %v462 = vadd.f32 %v459, %v461
    %v463 = vmax.f32 %v462, 0.0
    %s464 = sld [smem:[#allocation3 + $0x4a]]
    %v465 = vstv %s464
    %v466 = vmul.f32 %v84, %v465
    %s467 = sld [smem:[#allocation3 + $0x54]]
    %v468 = vstv %s467
    %v469 = vmul.f32 %v107, %v468
    %v470 = vadd.f32 %v466, %v469
    %s471 = sld [smem:[#allocation3 + $0x5e]]
    %v472 = vstv %s471
    %v473 = vmul.f32 %v130, %v472
    %v474 = vadd.f32 %v470, %v473
    %s475 = sld [smem:[#allocation3 + $0x68]]
    %v476 = vstv %s475
    %v477 = vmul.f32 %v153, %v476
    %v478 = vadd.f32 %v474, %v477
    %s479 = sld [smem:[#allocation3 + $0x72]]
    %v480 = vstv %s479
    %v481 = vmul.f32 %v176, %v480
    %v482 = vadd.f32 %v478, %v481
    %s483 = sld [smem:[#allocation3 + $0x7c]]
    %v484 = vstv %s483
    %v485 = vmul.f32 %v199, %v484
    %v486 = vadd.f32 %v482, %v485
    %s487 = sld [smem:[#allocation3 + $0x86]]
    %v488 = vstv %s487
    %v489 = vmul.f32 %v222, %v488
    %v490 = vadd.f32 %v486, %v489
    %s491 = sld [smem:[#allocation3 + $0x90]]
    %v492 = vstv %s491
    %v493 = vmul.f32 %v245, %v492
    %v494 = vadd.f32 %v490, %v493
    %s495 = sld [smem:[#allocation3 + $0x9a]]
    %v496 = vstv %s495
    %v497 = vmul.f32 %v268, %v496
    %v498 = vadd.f32 %v494, %v497
    %s499 = sld [smem:[#allocation3 + $0xa4]]
    %v500 = vstv %s499
    %v501 = vmul.f32 %v291, %v500
    %v502 = vadd.f32 %v498, %v501
    %s503 = sld [smem:[#allocation3 + $0xae]]
    %v504 = vstv %s503
    %v505 = vadd.f32 %v502, %v504
    %v506 = vmax.f32 %v505, 0.0
    %s507 = sld [smem:[#allocation3 + $0x4b]]
    %v508 = vstv %s507
    %v509 = vmul.f32 %v84, %v508
    %s510 = sld [smem:[#allocation3 + $0x55]]
    %v511 = vstv %s510
    %v512 = vmul.f32 %v107, %v511
    %v513 = vadd.f32 %v509, %v512
    %s514 = sld [smem:[#allocation3 + $0x5f]]
    %v515 = vstv %s514
    %v516 = vmul.f32 %v130, %v515
    %v517 = vadd.f32 %v513, %v516
    %s518 = sld [smem:[#allocation3 + $0x69]]
    %v519 = vstv %s518
    %v520 = vmul.f32 %v153, %v519
    %v521 = vadd.f32 %v517, %v520
    %s522 = sld [smem:[#allocation3 + $0x73]]
    %v523 = vstv %s522
    %v524 = vmul.f32 %v176, %v523
    %v525 = vadd.f32 %v521, %v524
    %s526 = sld [smem:[#allocation3 + $0x7d]]
    %v527 = vstv %s526
    %v528 = vmul.f32 %v199, %v527
    %v529 = vadd.f32 %v525, %v528
    %s530 = sld [smem:[#allocation3 + $0x87]]
    %v531 = vstv %s530
    %v532 = vmul.f32 %v222, %v531
    %v533 = vadd.f32 %v529, %v532
    %s534 = sld [smem:[#allocation3 + $0x91]]
    %v535 = vstv %s534
    %v536 = vmul.f32 %v245, %v535
    %v537 = vadd.f32 %v533, %v536
    %s538 = sld [smem:[#allocation3 + $0x9b]]
    %v539 = vstv %s538
    %v540 = vmul.f32 %v268, %v539
    %v541 = vadd.f32 %v537, %v540
    %s542 = sld [smem:[#allocation3 + $0xa5]]
    %v543 = vstv %s542
    %v544 = vmul.f32 %v291, %v543
    %v545 = vadd.f32 %v541, %v544
    %s546 = sld [smem:[#allocation3 + $0xaf]]
    %v547 = vstv %s546
    %v548 = vadd.f32 %v545, %v547
    %v549 = vmax.f32 %v548, 0.0
    %s550 = sld [smem:[#allocation3 + $0x4c]]
    %v551 = vstv %s550
    %v552 = vmul.f32 %v84, %v551
    %s553 = sld [smem:[#allocation3 + $0x56]]
    %v554 = vstv %s553
    %v555 = vmul.f32 %v107, %v554
    %v556 = vadd.f32 %v552, %v555
    %s557 = sld [smem:[#allocation3 + $0x60]]
    %v558 = vstv %s557
    %v559 = vmul.f32 %v130, %v558
    %v560 = vadd.f32 %v556, %v559
    %s561 = sld [smem:[#allocation3 + $0x6a]]
    %v562 = vstv %s561
    %v563 = vmul.f32 %v153, %v562
    %v564 = vadd.f32 %v560, %v563
    %s565 = sld [smem:[#allocation3 + $0x74]]
    %v566 = vstv %s565
    %v567 = vmul.f32 %v176, %v566
    %v568 = vadd.f32 %v564, %v567
    %s569 = sld [smem:[#allocation3 + $0x7e]]
    %v570 = vstv %s569
    %v571 = vmul.f32 %v199, %v570
    %v572 = vadd.f32 %v568, %v571
    %s573 = sld [smem:[#allocation3 + $0x88]]
    %v574 = vstv %s573
    %v575 = vmul.f32 %v222, %v574
    %v576 = vadd.f32 %v572, %v575
    %s577 = sld [smem:[#allocation3 + $0x92]]
    %v578 = vstv %s577
    %v579 = vmul.f32 %v245, %v578
    %v580 = vadd.f32 %v576, %v579
    %s581 = sld [smem:[#allocation3 + $0x9c]]
    %v582 = vstv %s581
    %v583 = vmul.f32 %v268, %v582
    %v584 = vadd.f32 %v580, %v583
    %s585 = sld [smem:[#allocation3 + $0xa6]]
    %v586 = vstv %s585
    %v587 = vmul.f32 %v291, %v586
    %v588 = vadd.f32 %v584, %v587
    %s589 = sld [smem:[#allocation3 + $0xb0]]
    %v590 = vstv %s589
    %v591 = vadd.f32 %v588, %v590
    %v592 = vmax.f32 %v591, 0.0
    %s593 = sld [smem:[#allocation3 + $0x4d]]
    %v594 = vstv %s593
    %v595 = vmul.f32 %v84, %v594
    %s596 = sld [smem:[#allocation3 + $0x57]]
    %v597 = vstv %s596
    %v598 = vmul.f32 %v107, %v597
    %v599 = vadd.f32 %v595, %v598
    %s600 = sld [smem:[#allocation3 + $0x61]]
    %v601 = vstv %s600
    %v602 = vmul.f32 %v130, %v601
    %v603 = vadd.f32 %v599, %v602
    %s604 = sld [smem:[#allocation3 + $0x6b]]
    %v605 = vstv %s604
    %v606 = vmul.f32 %v153, %v605
    %v607 = vadd.f32 %v603, %v606
    %s608 = sld [smem:[#allocation3 + $0x75]]
    %v609 = vstv %s608
    %v610 = vmul.f32 %v176, %v609
    %v611 = vadd.f32 %v607, %v610
    %s612 = sld [smem:[#allocation3 + $0x7f]]
    %v613 = vstv %s612
    %v614 = vmul.f32 %v199, %v613
    %v615 = vadd.f32 %v611, %v614
    %s616 = sld [smem:[#allocation3 + $0x89]]
    %v617 = vstv %s616
    %v618 = vmul.f32 %v222, %v617
    %v619 = vadd.f32 %v615, %v618
    %s620 = sld [smem:[#allocation3 + $0x93]]
    %v621 = vstv %s620
    %v622 = vmul.f32 %v245, %v621
    %v623 = vadd.f32 %v619, %v622
    %s624 = sld [smem:[#allocation3 + $0x9d]]
    %v625 = vstv %s624
    %v626 = vmul.f32 %v268, %v625
    %v627 = vadd.f32 %v623, %v626
    %s628 = sld [smem:[#allocation3 + $0xa7]]
    %v629 = vstv %s628
    %v630 = vmul.f32 %v291, %v629
    %v631 = vadd.f32 %v627, %v630
    %s632 = sld [smem:[#allocation3 + $0xb1]]
    %v633 = vstv %s632
    %v634 = vadd.f32 %v631, %v633
    %v635 = vmax.f32 %v634, 0.0
    %s636 = sld [smem:[#allocation3 + $0x4e]]
    %v637 = vstv %s636
    %v638 = vmul.f32 %v84, %v637
    %s639 = sld [smem:[#allocation3 + $0x58]]
    %v640 = vstv %s639
    %v641 = vmul.f32 %v107, %v640
    %v642 = vadd.f32 %v638, %v641
    %s643 = sld [smem:[#allocation3 + $0x62]]
    %v644 = vstv %s643
    %v645 = vmul.f32 %v130, %v644
    %v646 = vadd.f32 %v642, %v645
    %s647 = sld [smem:[#allocation3 + $0x6c]]
    %v648 = vstv %s647
    %v649 = vmul.f32 %v153, %v648
    %v650 = vadd.f32 %v646, %v649
    %s651 = sld [smem:[#allocation3 + $0x76]]
    %v652 = vstv %s651
    %v653 = vmul.f32 %v176, %v652
    %v654 = vadd.f32 %v650, %v653
    %s655 = sld [smem:[#allocation3 + $0x80]]
    %v656 = vstv %s655
    %v657 = vmul.f32 %v199, %v656
    %v658 = vadd.f32 %v654, %v657
    %s659 = sld [smem:[#allocation3 + $0x8a]]
    %v660 = vstv %s659
    %v661 = vmul.f32 %v222, %v660
    %v662 = vadd.f32 %v658, %v661
    %s663 = sld [smem:[#allocation3 + $0x94]]
    %v664 = vstv %s663
    %v665 = vmul.f32 %v245, %v664
    %v666 = vadd.f32 %v662, %v665
    %s667 = sld [smem:[#allocation3 + $0x9e]]
    %v668 = vstv %s667
    %v669 = vmul.f32 %v268, %v668
    %v670 = vadd.f32 %v666, %v669
    %s671 = sld [smem:[#allocation3 + $0xa8]]
    %v672 = vstv %s671
    %v673 = vmul.f32 %v291, %v672
    %v674 = vadd.f32 %v670, %v673
    %s675 = sld [smem:[#allocation3 + $0xb2]]
    %v676 = vstv %s675
    %v677 = vadd.f32 %v674, %v676
    %v678 = vmax.f32 %v677, 0.0
    %s679 = sld [smem:[#allocation3 + $0x4f]]
    %v680 = vstv %s679
    %v681 = vmul.f32 %v84, %v680
    %s682 = sld [smem:[#allocation3 + $0x59]]
    %v683 = vstv %s682
    %v684 = vmul.f32 %v107, %v683
    %v685 = vadd.f32 %v681, %v684
    %s686 = sld [smem:[#allocation3 + $0x63]]
    %v687 = vstv %s686
    %v688 = vmul.f32 %v130, %v687
    %v689 = vadd.f32 %v685, %v688
    %s690 = sld [smem:[#allocation3 + $0x6d]]
    %v691 = vstv %s690
    %v692 = vmul.f32 %v153, %v691
    %v693 = vadd.f32 %v689, %v692
    %s694 = sld [smem:[#allocation3 + $0x77]]
    %v695 = vstv %s694
    %v696 = vmul.f32 %v176, %v695
    %v697 = vadd.f32 %v693, %v696
    %s698 = sld [smem:[#allocation3 + $0x81]]
    %v699 = vstv %s698
    %v700 = vmul.f32 %v199, %v699
    %v701 = vadd.f32 %v697, %v700
    %s702 = sld [smem:[#allocation3 + $0x8b]]
    %v703 = vstv %s702
    %v704 = vmul.f32 %v222, %v703
    %v705 = vadd.f32 %v701, %v704
    %s706 = sld [smem:[#allocation3 + $0x95]]
    %v707 = vstv %s706
    %v708 = vmul.f32 %v245, %v707
    %v709 = vadd.f32 %v705, %v708
    %s710 = sld [smem:[#allocation3 + $0x9f]]
    %v711 = vstv %s710
    %v712 = vmul.f32 %v268, %v711
    %v713 = vadd.f32 %v709, %v712
    %s714 = sld [smem:[#allocation3 + $0xa9]]
    %v715 = vstv %s714
    %v716 = vmul.f32 %v291, %v715
    %v717 = vadd.f32 %v713, %v716
    %s718 = sld [smem:[#allocation3 + $0xb3]]
    %v719 = vstv %s718
    %v720 = vadd.f32 %v717, %v719
    %v721 = vmax.f32 %v720, 0.0
    %s722 = sld [smem:[#allocation3 + $0xb4]]
    %v723 = vstv %s722
    %v724 = vmul.f32 %v334, %v723
    %s725 = sld [smem:[#allocation3 + $0xb9]]
    %v726 = vstv %s725
    %v727 = vmul.f32 %v377, %v726
    %v728 = vadd.f32 %v724, %v727
    %s729 = sld [smem:[#allocation3 + $0xbe]]
    %v730 = vstv %s729
    %v731 = vmul.f32 %v420, %v730
    %v732 = vadd.f32 %v728, %v731
    %s733 = sld [smem:[#allocation3 + $0xc3]]
    %v734 = vstv %s733
    %v735 = vmul.f32 %v463, %v734
    %v736 = vadd.f32 %v732, %v735
    %s737 = sld [smem:[#allocation3 + $0xc8]]
    %v738 = vstv %s737
    %v739 = vmul.f32 %v506, %v738
    %v740 = vadd.f32 %v736, %v739
    %s741 = sld [smem:[#allocation3 + $0xcd]]
    %v742 = vstv %s741
    %v743 = vmul.f32 %v549, %v742
    %v744 = vadd.f32 %v740, %v743
    %s745 = sld [smem:[#allocation3 + $0xd2]]
    %v746 = vstv %s745
    %v747 = vmul.f32 %v592, %v746
    %v748 = vadd.f32 %v744, %v747
    %s749 = sld [smem:[#allocation3 + $0xd7]]
    %v750 = vstv %s749
    %v751 = vmul.f32 %v635, %v750
    %v752 = vadd.f32 %v748, %v751
    %s753 = sld [smem:[#allocation3 + $0xdc]]
    %v754 = vstv %s753
    %v755 = vmul.f32 %v678, %v754
    %v756 = vadd.f32 %v752, %v755
    %s757 = sld [smem:[#allocation3 + $0xe1]]
    %v758 = vstv %s757
    %v759 = vmul.f32 %v721, %v758
    %v760 = vadd.f32 %v756, %v759
    %s761 = sld [smem:[#allocation3 + $0xe6]]
    %v762 = vstv %s761
    %v763 = vadd.f32 %v760, %v762
    %v764 = vmax.f32 %v763, 0.0
    %s765 = sld [smem:[#allocation3 + $0xb5]]
    %v766 = vstv %s765
    %v767 = vmul.f32 %v334, %v766
    %s768 = sld [smem:[#allocation3 + $0xba]]
    %v769 = vstv %s768
    %v770 = vmul.f32 %v377, %v769
    %v771 = vadd.f32 %v767, %v770
    %s772 = sld [smem:[#allocation3 + $0xbf]]
    %v773 = vstv %s772
    %v774 = vmul.f32 %v420, %v773
    %v775 = vadd.f32 %v771, %v774
    %s776 = sld [smem:[#allocation3 + $0xc4]]
    %v777 = vstv %s776
    %v778 = vmul.f32 %v463, %v777
    %v779 = vadd.f32 %v775, %v778
    %s780 = sld [smem:[#allocation3 + $0xc9]]
    %v781 = vstv %s780
    %v782 = vmul.f32 %v506, %v781
    %v783 = vadd.f32 %v779, %v782
    %s784 = sld [smem:[#allocation3 + $0xce]]
    %v785 = vstv %s784
    %v786 = vmul.f32 %v549, %v785
    %v787 = vadd.f32 %v783, %v786
    %s788 = sld [smem:[#allocation3 + $0xd3]]
    %v789 = vstv %s788
    %v790 = vmul.f32 %v592, %v789
    %v791 = vadd.f32 %v787, %v790
    %s792 = sld [smem:[#allocation3 + $0xd8]]
    %v793 = vstv %s792
    %v794 = vmul.f32 %v635, %v793
    %v795 = vadd.f32 %v791, %v794
    %s796 = sld [smem:[#allocation3 + $0xdd]]
    %v797 = vstv %s796
    %v798 = vmul.f32 %v678, %v797
    %v799 = vadd.f32 %v795, %v798
    %s800 = sld [smem:[#allocation3 + $0xe2]]
    %v801 = vstv %s800
    %v802 = vmul.f32 %v721, %v801
    %v803 = vadd.f32 %v799, %v802
    %s804 = sld [smem:[#allocation3 + $0xe7]]
    %v805 = vstv %s804
    %v806 = vadd.f32 %v803, %v805
    %v807 = vmax.f32 %v806, 0.0
    %s808 = sld [smem:[#allocation3 + $0xb6]]
    %v809 = vstv %s808
    %v810 = vmul.f32 %v334, %v809
    %s811 = sld [smem:[#allocation3 + $0xbb]]
    %v812 = vstv %s811
    %v813 = vmul.f32 %v377, %v812
    %v814 = vadd.f32 %v810, %v813
    %s815 = sld [smem:[#allocation3 + $0xc0]]
    %v816 = vstv %s815
    %v817 = vmul.f32 %v420, %v816
    %v818 = vadd.f32 %v814, %v817
    %s819 = sld [smem:[#allocation3 + $0xc5]]
    %v820 = vstv %s819
    %v821 = vmul.f32 %v463, %v820
    %v822 = vadd.f32 %v818, %v821
    %s823 = sld [smem:[#allocation3 + $0xca]]
    %v824 = vstv %s823
    %v825 = vmul.f32 %v506, %v824
    %v826 = vadd.f32 %v822, %v825
    %s827 = sld [smem:[#allocation3 + $0xcf]]
    %v828 = vstv %s827
    %v829 = vmul.f32 %v549, %v828
    %v830 = vadd.f32 %v826, %v829
    %s831 = sld [smem:[#allocation3 + $0xd4]]
    %v832 = vstv %s831
    %v833 = vmul.f32 %v592, %v832
    %v834 = vadd.f32 %v830, %v833
    %s835 = sld [smem:[#allocation3 + $0xd9]]
    %v836 = vstv %s835
    %v837 = vmul.f32 %v635, %v836
    %v838 = vadd.f32 %v834, %v837
    %s839 = sld [smem:[#allocation3 + $0xde]]
    %v840 = vstv %s839
    %v841 = vmul.f32 %v678, %v840
    %v842 = vadd.f32 %v838, %v841
    %s843 = sld [smem:[#allocation3 + $0xe3]]
    %v844 = vstv %s843
    %v845 = vmul.f32 %v721, %v844
    %v846 = vadd.f32 %v842, %v845
    %s847 = sld [smem:[#allocation3 + $0xe8]]
    %v848 = vstv %s847
    %v849 = vadd.f32 %v846, %v848
    %v850 = vmax.f32 %v849, 0.0
    %s851 = sld [smem:[#allocation3 + $0xb7]]
    %v852 = vstv %s851
    %v853 = vmul.f32 %v334, %v852
    %s854 = sld [smem:[#allocation3 + $0xbc]]
    %v855 = vstv %s854
    %v856 = vmul.f32 %v377, %v855
    %v857 = vadd.f32 %v853, %v856
    %s858 = sld [smem:[#allocation3 + $0xc1]]
    %v859 = vstv %s858
    %v860 = vmul.f32 %v420, %v859
    %v861 = vadd.f32 %v857, %v860
    %s862 = sld [smem:[#allocation3 + $0xc6]]
    %v863 = vstv %s862
    %v864 = vmul.f32 %v463, %v863
    %v865 = vadd.f32 %v861, %v864
    %s866 = sld [smem:[#allocation3 + $0xcb]]
    %v867 = vstv %s866
    %v868 = vmul.f32 %v506, %v867
    %v869 = vadd.f32 %v865, %v868
    %s870 = sld [smem:[#allocation3 + $0xd0]]
    %v871 = vstv %s870
    %v872 = vmul.f32 %v549, %v871
    %v873 = vadd.f32 %v869, %v872
    %s874 = sld [smem:[#allocation3 + $0xd5]]
    %v875 = vstv %s874
    %v876 = vmul.f32 %v592, %v875
    %v877 = vadd.f32 %v873, %v876
    %s878 = sld [smem:[#allocation3 + $0xda]]
    %v879 = vstv %s878
    %v880 = vmul.f32 %v635, %v879
    %v881 = vadd.f32 %v877, %v880
    %s882 = sld [smem:[#allocation3 + $0xdf]]
    %v883 = vstv %s882
    %v884 = vmul.f32 %v678, %v883
    %v885 = vadd.f32 %v881, %v884
    %s886 = sld [smem:[#allocation3 + $0xe4]]
    %v887 = vstv %s886
    %v888 = vmul.f32 %v721, %v887
    %v889 = vadd.f32 %v885, %v888
    %s890 = sld [smem:[#allocation3 + $0xe9]]
    %v891 = vstv %s890
    %v892 = vadd.f32 %v889, %v891
    %v893 = vmax.f32 %v892, 0.0
    %s894 = sld [smem:[#allocation3 + $0xb8]]
    %v895 = vstv %s894
    %v896 = vmul.f32 %v334, %v895
    %s897 = sld [smem:[#allocation3 + $0xbd]]
    %v898 = vstv %s897
    %v899 = vmul.f32 %v377, %v898
    %v900 = vadd.f32 %v896, %v899
    %s901 = sld [smem:[#allocation3 + $0xc2]]
    %v902 = vstv %s901
    %v903 = vmul.f32 %v420, %v902
    %v904 = vadd.f32 %v900, %v903
    %s905 = sld [smem:[#allocation3 + $0xc7]]
    %v906 = vstv %s905
    %v907 = vmul.f32 %v463, %v906
    %v908 = vadd.f32 %v904, %v907
    %s909 = sld [smem:[#allocation3 + $0xcc]]
    %v910 = vstv %s909
    %v911 = vmul.f32 %v506, %v910
    %v912 = vadd.f32 %v908, %v911
    %s913 = sld [smem:[#allocation3 + $0xd1]]
    %v914 = vstv %s913
    %v915 = vmul.f32 %v549, %v914
    %v916 = vadd.f32 %v912, %v915
    %s917 = sld [smem:[#allocation3 + $0xd6]]
    %v918 = vstv %s917
    %v919 = vmul.f32 %v592, %v918
    %v920 = vadd.f32 %v916, %v919
    %s921 = sld [smem:[#allocation3 + $0xdb]]
    %v922 = vstv %s921
    %v923 = vmul.f32 %v635, %v922
    %v924 = vadd.f32 %v920, %v923
    %s925 = sld [smem:[#allocation3 + $0xe0]]
    %v926 = vstv %s925
    %v927 = vmul.f32 %v678, %v926
    %v928 = vadd.f32 %v924, %v927
    %s929 = sld [smem:[#allocation3 + $0xe5]]
    %v930 = vstv %s929
    %v931 = vmul.f32 %v721, %v930
    %v932 = vadd.f32 %v928, %v931
    %s933 = sld [smem:[#allocation3 + $0xea]]
    %v934 = vstv %s933
    %v935 = vadd.f32 %v932, %v934
    %v936 = vmax.f32 %v935, 0.0
    %s937 = sld [smem:[#allocation3 + $0xeb]]
    %v938 = vstv %s937
    %v939 = vmul.f32 %v764, %v938
    %s940 = sld [smem:[#allocation3 + $0xec]]
    %v941 = vstv %s940
    %v942 = vmul.f32 %v807, %v941
    %v943 = vadd.f32 %v939, %v942
    %s944 = sld [smem:[#allocation3 + $0xed]]
    %v945 = vstv %s944
    %v946 = vmul.f32 %v850, %v945
    %v947 = vadd.f32 %v943, %v946
    %s948 = sld [smem:[#allocation3 + $0xee]]
    %v949 = vstv %s948
    %v950 = vmul.f32 %v893, %v949
    %v951 = vadd.f32 %v947, %v950
    %s952 = sld [smem:[#allocation3 + $0xef]]
    %v953 = vstv %s952
    %v954 = vmul.f32 %v936, %v953
    %v955 = vadd.f32 %v951, %v954
    %s956 = sld [smem:[#allocation3 + $0xf0]]
    %v957 = vstv %s956
    %v958 = vadd.f32 %v955, %v957
    %v959 = vmax.f32 %v958, 0.0
    %960 = vst [vmem:[#allocation7] sm:$0xff] %v959
    // Predicated region
    $region10: #{tpu_custom_call.1} parent=1 // pred_check
      _
    $region11: #{tpu_custom_call.1} parent=1 // pred_check_branch
      %962 = sbr.rel (0) target = $region13
    $region12: #{tpu_custom_call.1} parent=1 // pred_region
      %s964 = ssub.s32 128, 128
      %965 = vsyncadd [#allocation6], %s964
      %s967 = sshll.u32 [#allocation7], 4
      %s968 = int_to_ptr.vmem [resolvable:$true] %s967
      %970 = dma.vmem_to_hbm [thread:$0]  %s968, 128, %s2, [#allocation6]
    $region13: #{tpu_custom_call.1} parent=1 // pred_fallthru
      _
    // Predicated region
    $region14: #{tpu_custom_call.1} parent=1 // pred_check
      _
    $region15: #{tpu_custom_call.1} parent=1 // pred_check_branch
      %972 = sbr.rel (0) target = $region17
    $region16: #{tpu_custom_call.1} parent=1 // pred_region
      %973 = dma.done [#allocation6], 128
    $region17: #{tpu_custom_call.1} parent=1 // pred_fallthru
      _
    %974 = vsyncpa [#allocation5], 1
    %975 = vsyncpa [#allocation6], 1

</llo_original>
